<compile_context>
chip_gen: v7x
topology: tpu7x:2x2x1
jax: 0.10.0
libtpu: 0.0.40
codegen_flags: <defaults>
</compile_context>

<pallas_src>
import jax
import jax.numpy as jnp
from jax.experimental import pallas as pl
from jax.experimental.pallas import tpu as pltpu

LANE = 128
SUBLANE_BF16 = 16  # bf16 packs 16 rows per vreg


def _round_up(n, m):
    return ((n + m - 1) // m) * m


# ---------------------------------------------------------------------------
# Kernels
# ---------------------------------------------------------------------------
def _tail_layers(h, layers, o_ref):
    """(matmul + bias [+ relu]) chain; last layer written to o_ref."""
    n = len(layers)
    for li, (w_ref, b_ref) in enumerate(layers):
        acc = jnp.dot(h, w_ref[...],
                      preferred_element_type=jnp.float32) + b_ref[...]
        if li < n - 1:
            h = jnp.maximum(acc, 0.0).astype(jnp.bfloat16)
        else:
            o_ref[...] = acc.astype(o_ref.dtype)


def _mlp5_kernel(x_ref,
                 w1_ref, b1_ref, w2_ref, b2_ref, w3_ref, b3_ref,
                 w4_ref, b4_ref, w5_ref, b5_ref, o_ref):
    h = x_ref[...].astype(jnp.bfloat16)
    _tail_layers(h,
                 ((w1_ref, b1_ref), (w2_ref, b2_ref), (w3_ref, b3_ref),
                  (w4_ref, b4_ref), (w5_ref, b5_ref)),
                 o_ref)


def _mlp5_kernel_ktiled(x_ref,
                        w1_ref, b1_ref, w2_ref, b2_ref, w3_ref, b3_ref,
                        w4_ref, b4_ref, w5_ref, b5_ref, o_ref, acc_ref):
    """First matmul K-tiled over grid axis 1; f32 VMEM accumulator."""
    k = pl.program_id(1)

    @pl.when(k == 0)
    def _init():
        acc_ref[...] = jnp.zeros_like(acc_ref)

    acc_ref[...] += jnp.dot(x_ref[...].astype(jnp.bfloat16), w1_ref[...],
                            preferred_element_type=jnp.float32)

    @pl.when(k == pl.num_programs(1) - 1)
    def _finish():
        h = jnp.maximum(acc_ref[...] + b1_ref[...], 0.0).astype(jnp.bfloat16)
        _tail_layers(h,
                     ((w2_ref, b2_ref), (w3_ref, b3_ref),
                      (w4_ref, b4_ref), (w5_ref, b5_ref)),
                     o_ref)


# ---------------------------------------------------------------------------
# Host-side wrappers
# ---------------------------------------------------------------------------
def prepare_params(params):
    """One-time (hoisted) pad + cast of the 5 (W_t (in,out), b) param pairs."""
    in_dim = params[0][0].shape[0]
    out_dim = params[-1][0].shape[1]
    in_pad = _round_up(in_dim, LANE)
    weights, biases = [], []
    cur = in_pad
    for wt, b in params:
        fi, fo = wt.shape
        fo_pad = _round_up(fo, LANE)
        w_p = jnp.zeros((cur, fo_pad), jnp.bfloat16).at[:fi, :fo].set(
            wt.astype(jnp.bfloat16))
        b_p = jnp.zeros((1, fo_pad), jnp.float32).at[0, :fo].set(
            b.astype(jnp.float32))
        weights.append(w_p)
        biases.append(b_p)
        cur = fo_pad
    return dict(weights=tuple(weights), biases=tuple(biases),
                in_dim=in_dim, out_dim=out_dim, in_pad=in_pad, out_pad=cur)


def concat_linear_5_pallas(x, prepared, *, tm=256, k_tile=None):
    """x: (B, input_dim) f32 or bf16.  prepared: output of prepare_params."""
    B, in_dim = x.shape
    assert in_dim == prepared["in_dim"]
    ws, bs = prepared["weights"], prepared["biases"]
    in_pad, out_pad = prepared["in_pad"], prepared["out_pad"]
    out_dim = prepared["out_dim"]
    d1_pad = ws[0].shape[1]

    # ---- batch tiling: multiples of 16 rows; cap the tile so large batches
    # get >=2 grid steps (both v7x TensorCores work); tiny B stays one tile.
    tm_eff = min(tm, _round_up(B, SUBLANE_BF16))
    if B >= 2 * SUBLANE_BF16:
        tm_eff = min(tm_eff, _round_up(pl.cdiv(B, 2), SUBLANE_BF16))
    n_bt = pl.cdiv(B, tm_eff)
    b_pad = n_bt * tm_eff

    x_p = x
    if (b_pad, in_pad) != (B, in_dim):
        x_p = jnp.zeros((b_pad, in_pad), x.dtype).at[:B, :in_dim].set(x)

    # ---- K-tile the first (largest) matmul only when its K dim is big enough
    # to threaten VMEM (v7x: 64 MiB per TensorCore).
    if k_tile is None:
        k_tile = 1024 if in_pad >= 4096 else in_pad
    k_tile = min(max(LANE, (k_tile // LANE) * LANE), in_pad)
    while in_pad % k_tile:
        k_tile -= LANE
    n_kt = in_pad // k_tile
    ktiled = n_kt > 1

    itemsize = jnp.dtype(x.dtype).itemsize
    weight_bytes = sum(int(w.size) * 2 for w in ws)
    bias_bytes = sum(int(b.size) * 4 for b in bs)
    flops = 2 * b_pad * sum(int(w.shape[0]) * int(w.shape[1]) for w in ws)
    bytes_accessed = (int(x_p.size) * itemsize + weight_bytes + bias_bytes
                      + b_pad * out_pad * itemsize)
    cost = pl.CostEstimate(flops=flops, transcendentals=0,
                           bytes_accessed=bytes_accessed)

    vmem_needed = (weight_bytes + bias_bytes
                   + 2 * tm_eff * k_tile * itemsize           # x tile (2 bufs)
                   + 2 * tm_eff * out_pad * itemsize          # out tile (2 bufs)
                   + (tm_eff * d1_pad * 4 if ktiled else 0)   # f32 accumulator
                   + (k_tile * d1_pad * 2 if ktiled else 0))  # extra W1 buffer
    vmem_limit = min(64 * 1024 * 1024,
                     max(32 * 1024 * 1024, int(vmem_needed * 3 // 2)))

    out_shape = jax.ShapeDtypeStruct((b_pad, out_pad), x.dtype)

    def build_and_run(single_buffer_weights):
        def const_spec(arr):
            index_map = (lambda i, k: (0, 0)) if ktiled else (lambda i: (0, 0))
            if single_buffer_weights:
                # Grid-invariant block: single buffer halves weight VMEM.
                return pl.BlockSpec(arr.shape, index_map,
                                    pipeline_mode=pl.Buffered(1))
            return pl.BlockSpec(arr.shape, index_map)

        if ktiled:
            in_specs = [pl.BlockSpec((tm_eff, k_tile), lambda i, k: (i, k)),
                        pl.BlockSpec((k_tile, d1_pad), lambda i, k: (k, 0)),
                        const_spec(bs[0])]
            for w, b in zip(ws[1:], bs[1:]):
                in_specs += [const_spec(w), const_spec(b)]
            out_spec = pl.BlockSpec((tm_eff, out_pad), lambda i, k: (i, 0))
            grid = (n_bt, n_kt)
            kernel = _mlp5_kernel_ktiled
            scratch = [pltpu.VMEM((tm_eff, d1_pad), jnp.float32)]
            dims = ("parallel", "arbitrary")
        else:
            in_specs = [pl.BlockSpec((tm_eff, in_pad), lambda i: (i, 0))]
            for w, b in zip(ws, bs):
                in_specs += [const_spec(w), const_spec(b)]
            out_spec = pl.BlockSpec((tm_eff, out_pad), lambda i: (i, 0))
            grid = (n_bt,)
            kernel = _mlp5_kernel
            scratch = []
            dims = ("parallel",)

        operands = [x_p]
        for w, b in zip(ws, bs):
            operands += [w, b]

        return pl.pallas_call(
            kernel,
            out_shape=out_shape,
            grid_spec=pltpu.PrefetchScalarGridSpec(
                num_scalar_prefetch=0,
                grid=grid,
                in_specs=in_specs,
                out_specs=out_spec,
                scratch_shapes=scratch),
            compiler_params=pltpu.CompilerParams(
                dimension_semantics=dims,
                vmem_limit_bytes=vmem_limit),
            cost_estimate=cost,
        )(*operands)

    try:
        out = build_and_run(single_buffer_weights=True)
    except Exception:
        # Fallback if this Pallas version rejects Buffered(1); semantics equal.
        out = build_and_run(single_buffer_weights=False)

    return out[:B, :out_dim]


# ---------------------------------------------------------------------------
# Init + references
# ---------------------------------------------------------------------------
def init_params(key, input_dim, output_dim):
    """nn.Linear-style init. Returns list of (W_transposed (in,out), bias)."""
    dims = [input_dim, input_dim // 2, input_dim // 4,
            input_dim // 8, input_dim // 16, output_dim]
    params = []
    for i in range(5):
        fan_in, fan_out = dims[i], dims[i + 1]
        key, kw, kb = jax.random.split(key, 3)
        bound = 1.0 / jnp.sqrt(fan_in)
        wt = jax.random.uniform(kw, (fan_in, fan_out), jnp.float32, -bound, bound)
        b = jax.random.uniform(kb, (fan_out,), jnp.float32, -bound, bound)
        params.append((wt, b))
    return params


def reference_forward(x, params):
    """Pure-JAX reference with the same bf16-input / f32-accumulate path."""
    h = x
    for i, (wt, b) in enumerate(params):
        h = jnp.dot(h.astype(jnp.bfloat16), wt.astype(jnp.bfloat16),
                    preferred_element_type=jnp.float32) + b
        if i < 4:
            h = jnp.maximum(h, 0.0)
    return h.astype(x.dtype)


def reference_forward_f32(x, params):
    """True f32 reference (PyTorch semantics)."""
    h = x
    for i, (wt, b) in enumerate(params):
        h = h @ wt + b
        if i < 4:
            h = jnp.maximum(h, 0.0)
    return h


if __name__ == "__main__":
    key = jax.random.PRNGKey(0)
    batch, input_dim, output_dim = 8, 512, 64

    kx, kp = jax.random.split(key)
    x = jax.random.normal(kx, (batch, input_dim), jnp.float32)
    params = init_params(kp, input_dim, output_dim)
    prepared = prepare_params(params)          # hoisted pad/cast, done once

    # Path 1: fused single-pass kernel (small batch, single tile).
    out = jax.block_until_ready(concat_linear_5_pallas(x, prepared))
    ref = reference_forward(x, params)
    ref_f32 = reference_forward_f32(x, params)
    assert out.shape == (batch, output_dim), out.shape
    assert jnp.allclose(out, ref, atol=2e-3, rtol=2e-3), "mismatch vs bf16 reference"
    assert jnp.allclose(out, ref_f32, atol=1e-1, rtol=1e-1), "mismatch vs f32 reference"

    # Path 2: K-tiled first matmul (the large-input_dim / v7x path), forced small.
    out_kt = jax.block_until_ready(concat_linear_5_pallas(x, prepared, k_tile=128))
    assert jnp.allclose(out_kt, ref, atol=2e-3, rtol=2e-3), "K-tiled path mismatch"

    # Path 3: multi-tile batch grid (>=2 tiles so both v7x TCs get work).
    x2 = jax.random.normal(jax.random.PRNGKey(1), (48, input_dim), jnp.float32)
    out2 = jax.block_until_ready(concat_linear_5_pallas(x2, prepared))
    ref2 = reference_forward(x2, params)
    assert out2.shape == (48, output_dim)
    assert jnp.allclose(out2, ref2, atol=2e-3, rtol=2e-3), "multi-tile path mismatch"

    print("KERNEL_OK")
</pallas_src>

<mosaic_0001>
module attributes {stable_mosaic.version = 11 : i64} {
  func.func @_mlp5_kernel(%arg0: i32, %arg1: memref<16x512xf32, #tpu.memory_space<vmem>>, %arg2: memref<512x256xbf16, #tpu.memory_space<vmem>>, %arg3: memref<1x256xf32, #tpu.memory_space<vmem>>, %arg4: memref<256x128xbf16, #tpu.memory_space<vmem>>, %arg5: memref<1x128xf32, #tpu.memory_space<vmem>>, %arg6: memref<128x128xbf16, #tpu.memory_space<vmem>>, %arg7: memref<1x128xf32, #tpu.memory_space<vmem>>, %arg8: memref<128x128xbf16, #tpu.memory_space<vmem>>, %arg9: memref<1x128xf32, #tpu.memory_space<vmem>>, %arg10: memref<128x128xbf16, #tpu.memory_space<vmem>>, %arg11: memref<1x128xf32, #tpu.memory_space<vmem>>, %arg12: memref<16x128xf32, #tpu.memory_space<vmem>>) attributes {dimension_semantics = [#tpu.dimension_semantics<parallel>], iteration_bounds = array<i64: 1>, scalar_prefetch = 0 : i64, scratch_operands = 0 : i64, tpu.core_type = #tpu.core_type<tc>, window_params = [{transform_indices = @transform_0, window_bounds = array<i64: 16, 512>}, {pipeline_mode = #tpu.pipeline_mode<synchronous>, transform_indices = @transform_1, window_bounds = array<i64: 512, 256>}, {pipeline_mode = #tpu.pipeline_mode<synchronous>, transform_indices = @transform_2, window_bounds = array<i64: 1, 256>}, {pipeline_mode = #tpu.pipeline_mode<synchronous>, transform_indices = @transform_3, window_bounds = array<i64: 256, 128>}, {pipeline_mode = #tpu.pipeline_mode<synchronous>, transform_indices = @transform_4, window_bounds = array<i64: 1, 128>}, {pipeline_mode = #tpu.pipeline_mode<synchronous>, transform_indices = @transform_5, window_bounds = array<i64: 128, 128>}, {pipeline_mode = #tpu.pipeline_mode<synchronous>, transform_indices = @transform_6, window_bounds = array<i64: 1, 128>}, {pipeline_mode = #tpu.pipeline_mode<synchronous>, transform_indices = @transform_7, window_bounds = array<i64: 128, 128>}, {pipeline_mode = #tpu.pipeline_mode<synchronous>, transform_indices = @transform_8, window_bounds = array<i64: 1, 128>}, {pipeline_mode = #tpu.pipeline_mode<synchronous>, transform_indices = @transform_9, window_bounds = array<i64: 128, 128>}, {pipeline_mode = #tpu.pipeline_mode<synchronous>, transform_indices = @transform_10, window_bounds = array<i64: 1, 128>}, {transform_indices = @transform_11, window_bounds = array<i64: 16, 128>}]} {
    %c0 = arith.constant 0 : index
    %c0_0 = arith.constant 0 : index
    %0 = vector.load %arg1[%c0, %c0_0] : memref<16x512xf32, #tpu.memory_space<vmem>>, vector<16x512xf32>
    %1 = arith.truncf %0 : vector<16x512xf32> to vector<16x512xbf16>
    %c0_1 = arith.constant 0 : index
    %c0_2 = arith.constant 0 : index
    %2 = vector.load %arg2[%c0_1, %c0_2] : memref<512x256xbf16, #tpu.memory_space<vmem>>, vector<512x256xbf16>
    %cst = arith.constant dense<0.000000e+00> : vector<16x256xf32>
    %3 = tpu.matmul %1, %2, %cst {dimension_numbers = #tpu.dot_dimension_numbers<[1], [0], [0], [1], [0, 0, 1, 1], [], []>} : vector<16x512xbf16>, vector<512x256xbf16>, vector<16x256xf32> -> vector<16x256xf32>
    %c0_3 = arith.constant 0 : index
    %c0_4 = arith.constant 0 : index
    %4 = vector.load %arg3[%c0_3, %c0_4] : memref<1x256xf32, #tpu.memory_space<vmem>>, vector<1x256xf32>
    %5 = vector.broadcast %4 : vector<1x256xf32> to vector<16x256xf32>
    %6 = arith.addf %3, %5 : vector<16x256xf32>
    %cst_5 = arith.constant 0.000000e+00 : f32
    %7 = vector.broadcast %cst_5 : f32 to vector<16x256xf32>
    %8 = arith.maximumf %6, %7 : vector<16x256xf32>
    %9 = arith.truncf %8 : vector<16x256xf32> to vector<16x256xbf16>
    %c0_6 = arith.constant 0 : index
    %c0_7 = arith.constant 0 : index
    %10 = vector.load %arg4[%c0_6, %c0_7] : memref<256x128xbf16, #tpu.memory_space<vmem>>, vector<256x128xbf16>
    %cst_8 = arith.constant dense<0.000000e+00> : vector<16x128xf32>
    %11 = tpu.matmul %9, %10, %cst_8 {dimension_numbers = #tpu.dot_dimension_numbers<[1], [0], [0], [1], [0, 0, 1, 1], [], []>} : vector<16x256xbf16>, vector<256x128xbf16>, vector<16x128xf32> -> vector<16x128xf32>
    %c0_9 = arith.constant 0 : index
    %c0_10 = arith.constant 0 : index
    %12 = vector.load %arg5[%c0_9, %c0_10] : memref<1x128xf32, #tpu.memory_space<vmem>>, vector<1x128xf32>
    %13 = vector.broadcast %12 : vector<1x128xf32> to vector<16x128xf32>
    %14 = arith.addf %11, %13 : vector<16x128xf32>
    %cst_11 = arith.constant 0.000000e+00 : f32
    %15 = vector.broadcast %cst_11 : f32 to vector<16x128xf32>
    %16 = arith.maximumf %14, %15 : vector<16x128xf32>
    %17 = arith.truncf %16 : vector<16x128xf32> to vector<16x128xbf16>
    %c0_12 = arith.constant 0 : index
    %c0_13 = arith.constant 0 : index
    %18 = vector.load %arg6[%c0_12, %c0_13] : memref<128x128xbf16, #tpu.memory_space<vmem>>, vector<128x128xbf16>
    %cst_14 = arith.constant dense<0.000000e+00> : vector<16x128xf32>
    %19 = tpu.matmul %17, %18, %cst_14 {dimension_numbers = #tpu.dot_dimension_numbers<[1], [0], [0], [1], [0, 0, 1, 1], [], []>} : vector<16x128xbf16>, vector<128x128xbf16>, vector<16x128xf32> -> vector<16x128xf32>
    %c0_15 = arith.constant 0 : index
    %c0_16 = arith.constant 0 : index
    %20 = vector.load %arg7[%c0_15, %c0_16] : memref<1x128xf32, #tpu.memory_space<vmem>>, vector<1x128xf32>
    %21 = vector.broadcast %20 : vector<1x128xf32> to vector<16x128xf32>
    %22 = arith.addf %19, %21 : vector<16x128xf32>
    %cst_17 = arith.constant 0.000000e+00 : f32
    %23 = vector.broadcast %cst_17 : f32 to vector<16x128xf32>
    %24 = arith.maximumf %22, %23 : vector<16x128xf32>
    %25 = arith.truncf %24 : vector<16x128xf32> to vector<16x128xbf16>
    %c0_18 = arith.constant 0 : index
    %c0_19 = arith.constant 0 : index
    %26 = vector.load %arg8[%c0_18, %c0_19] : memref<128x128xbf16, #tpu.memory_space<vmem>>, vector<128x128xbf16>
    %cst_20 = arith.constant dense<0.000000e+00> : vector<16x128xf32>
    %27 = tpu.matmul %25, %26, %cst_20 {dimension_numbers = #tpu.dot_dimension_numbers<[1], [0], [0], [1], [0, 0, 1, 1], [], []>} : vector<16x128xbf16>, vector<128x128xbf16>, vector<16x128xf32> -> vector<16x128xf32>
    %c0_21 = arith.constant 0 : index
    %c0_22 = arith.constant 0 : index
    %28 = vector.load %arg9[%c0_21, %c0_22] : memref<1x128xf32, #tpu.memory_space<vmem>>, vector<1x128xf32>
    %29 = vector.broadcast %28 : vector<1x128xf32> to vector<16x128xf32>
    %30 = arith.addf %27, %29 : vector<16x128xf32>
    %cst_23 = arith.constant 0.000000e+00 : f32
    %31 = vector.broadcast %cst_23 : f32 to vector<16x128xf32>
    %32 = arith.maximumf %30, %31 : vector<16x128xf32>
    %33 = arith.truncf %32 : vector<16x128xf32> to vector<16x128xbf16>
    %c0_24 = arith.constant 0 : index
    %c0_25 = arith.constant 0 : index
    %34 = vector.load %arg10[%c0_24, %c0_25] : memref<128x128xbf16, #tpu.memory_space<vmem>>, vector<128x128xbf16>
    %cst_26 = arith.constant dense<0.000000e+00> : vector<16x128xf32>
    %35 = tpu.matmul %33, %34, %cst_26 {dimension_numbers = #tpu.dot_dimension_numbers<[1], [0], [0], [1], [0, 0, 1, 1], [], []>} : vector<16x128xbf16>, vector<128x128xbf16>, vector<16x128xf32> -> vector<16x128xf32>
    %c0_27 = arith.constant 0 : index
    %c0_28 = arith.constant 0 : index
    %36 = vector.load %arg11[%c0_27, %c0_28] : memref<1x128xf32, #tpu.memory_space<vmem>>, vector<1x128xf32>
    %37 = vector.broadcast %36 : vector<1x128xf32> to vector<16x128xf32>
    %38 = arith.addf %35, %37 : vector<16x128xf32>
    %c0_29 = arith.constant 0 : index
    %c0_30 = arith.constant 0 : index
    %39 = vector.load %arg12[%c0_29, %c0_30] : memref<16x128xf32, #tpu.memory_space<vmem>>, vector<16x128xf32>
    tpu.vector_store %arg12[%c0_29, %c0_30], %38 {strides = array<i32>} : memref<16x128xf32, #tpu.memory_space<vmem>>, vector<16x128xf32>,
    return
  }
  func.func @transform_0(%arg0: i32) -> (i32, i32) {
    %c0_i32 = arith.constant 0 : i32
    %c0_i32_0 = arith.constant 0 : i32
    return %arg0, %c0_i32 : i32, i32
  }
  func.func @transform_1(%arg0: i32) -> (i32, i32) {
    %c0_i32 = arith.constant 0 : i32
    %c0_i32_0 = arith.constant 0 : i32
    %c0_i32_1 = arith.constant 0 : i32
    return %c0_i32, %c0_i32_0 : i32, i32
  }
  func.func @transform_2(%arg0: i32) -> (i32, i32) {
    %c0_i32 = arith.constant 0 : i32
    %c0_i32_0 = arith.constant 0 : i32
    %c0_i32_1 = arith.constant 0 : i32
    return %c0_i32, %c0_i32_0 : i32, i32
  }
  func.func @transform_3(%arg0: i32) -> (i32, i32) {
    %c0_i32 = arith.constant 0 : i32
    %c0_i32_0 = arith.constant 0 : i32
    %c0_i32_1 = arith.constant 0 : i32
    return %c0_i32, %c0_i32_0 : i32, i32
  }
  func.func @transform_4(%arg0: i32) -> (i32, i32) {
    %c0_i32 = arith.constant 0 : i32
    %c0_i32_0 = arith.constant 0 : i32
    %c0_i32_1 = arith.constant 0 : i32
    return %c0_i32, %c0_i32_0 : i32, i32
  }
  func.func @transform_5(%arg0: i32) -> (i32, i32) {
    %c0_i32 = arith.constant 0 : i32
    %c0_i32_0 = arith.constant 0 : i32
    %c0_i32_1 = arith.constant 0 : i32
    return %c0_i32, %c0_i32_0 : i32, i32
  }
  func.func @transform_6(%arg0: i32) -> (i32, i32) {
    %c0_i32 = arith.constant 0 : i32
    %c0_i32_0 = arith.constant 0 : i32
    %c0_i32_1 = arith.constant 0 : i32
    return %c0_i32, %c0_i32_0 : i32, i32
  }
  func.func @transform_7(%arg0: i32) -> (i32, i32) {
    %c0_i32 = arith.constant 0 : i32
    %c0_i32_0 = arith.constant 0 : i32
    %c0_i32_1 = arith.constant 0 : i32
    return %c0_i32, %c0_i32_0 : i32, i32
  }
  func.func @transform_8(%arg0: i32) -> (i32, i32) {
    %c0_i32 = arith.constant 0 : i32
    %c0_i32_0 = arith.constant 0 : i32
    %c0_i32_1 = arith.constant 0 : i32
    return %c0_i32, %c0_i32_0 : i32, i32
  }
  func.func @transform_9(%arg0: i32) -> (i32, i32) {
    %c0_i32 = arith.constant 0 : i32
    %c0_i32_0 = arith.constant 0 : i32
    %c0_i32_1 = arith.constant 0 : i32
    return %c0_i32, %c0_i32_0 : i32, i32
  }
  func.func @transform_10(%arg0: i32) -> (i32, i32) {
    %c0_i32 = arith.constant 0 : i32
    %c0_i32_0 = arith.constant 0 : i32
    %c0_i32_1 = arith.constant 0 : i32
    return %c0_i32, %c0_i32_0 : i32, i32
  }
  func.func @transform_11(%arg0: i32) -> (i32, i32) {
    %c0_i32 = arith.constant 0 : i32
    %c0_i32_0 = arith.constant 0 : i32
    return %arg0, %c0_i32 : i32, i32
  }
}

module attributes {stable_mosaic.version = 11 : i64} {
  func.func @_mlp5_kernel(%arg0: i32, %arg1: memref<16x512xf32, #tpu.memory_space<vmem>>, %arg2: memref<512x256xbf16, #tpu.memory_space<vmem>>, %arg3: memref<1x256xf32, #tpu.memory_space<vmem>>, %arg4: memref<256x128xbf16, #tpu.memory_space<vmem>>, %arg5: memref<1x128xf32, #tpu.memory_space<vmem>>, %arg6: memref<128x128xbf16, #tpu.memory_space<vmem>>, %arg7: memref<1x128xf32, #tpu.memory_space<vmem>>, %arg8: memref<128x128xbf16, #tpu.memory_space<vmem>>, %arg9: memref<1x128xf32, #tpu.memory_space<vmem>>, %arg10: memref<128x128xbf16, #tpu.memory_space<vmem>>, %arg11: memref<1x128xf32, #tpu.memory_space<vmem>>, %arg12: memref<16x128xf32, #tpu.memory_space<vmem>>) attributes {dimension_semantics = [#tpu.dimension_semantics<parallel>], iteration_bounds = array<i64: 1>, scalar_prefetch = 0 : i64, scratch_operands = 0 : i64, tpu.core_type = #tpu.core_type<tc>, window_params = [{transform_indices = @transform_0, window_bounds = array<i64: 16, 512>}, {pipeline_mode = #tpu.pipeline_mode<synchronous>, transform_indices = @transform_1, window_bounds = array<i64: 512, 256>}, {pipeline_mode = #tpu.pipeline_mode<synchronous>, transform_indices = @transform_2, window_bounds = array<i64: 1, 256>}, {pipeline_mode = #tpu.pipeline_mode<synchronous>, transform_indices = @transform_3, window_bounds = array<i64: 256, 128>}, {pipeline_mode = #tpu.pipeline_mode<synchronous>, transform_indices = @transform_4, window_bounds = array<i64: 1, 128>}, {pipeline_mode = #tpu.pipeline_mode<synchronous>, transform_indices = @transform_5, window_bounds = array<i64: 128, 128>}, {pipeline_mode = #tpu.pipeline_mode<synchronous>, transform_indices = @transform_6, window_bounds = array<i64: 1, 128>}, {pipeline_mode = #tpu.pipeline_mode<synchronous>, transform_indices = @transform_7, window_bounds = array<i64: 128, 128>}, {pipeline_mode = #tpu.pipeline_mode<synchronous>, transform_indices = @transform_8, window_bounds = array<i64: 1, 128>}, {pipeline_mode = #tpu.pipeline_mode<synchronous>, transform_indices = @transform_9, window_bounds = array<i64: 128, 128>}, {pipeline_mode = #tpu.pipeline_mode<synchronous>, transform_indices = @transform_10, window_bounds = array<i64: 1, 128>}, {transform_indices = @transform_11, window_bounds = array<i64: 16, 128>}]} {
    %c0 = arith.constant 0 : index
    %c0_0 = arith.constant 0 : index
    %0 = vector.load %arg1[%c0, %c0_0] : memref<16x512xf32, #tpu.memory_space<vmem>>, vector<16x512xf32>
    %1 = arith.truncf %0 : vector<16x512xf32> to vector<16x512xbf16>
    %c0_1 = arith.constant 0 : index
    %c0_2 = arith.constant 0 : index
    %2 = vector.load %arg2[%c0_1, %c0_2] : memref<512x256xbf16, #tpu.memory_space<vmem>>, vector<512x256xbf16>
    %cst = arith.constant dense<0.000000e+00> : vector<16x256xf32>
    %3 = tpu.matmul %1, %2, %cst {dimension_numbers = #tpu.dot_dimension_numbers<[1], [0], [0], [1], [0, 0, 1, 1], [], []>} : vector<16x512xbf16>, vector<512x256xbf16>, vector<16x256xf32> -> vector<16x256xf32>
    %c0_3 = arith.constant 0 : index
    %c0_4 = arith.constant 0 : index
    %4 = vector.load %arg3[%c0_3, %c0_4] : memref<1x256xf32, #tpu.memory_space<vmem>>, vector<1x256xf32>
    %5 = vector.broadcast %4 : vector<1x256xf32> to vector<16x256xf32>
    %6 = arith.addf %3, %5 : vector<16x256xf32>
    %cst_5 = arith.constant 0.000000e+00 : f32
    %7 = vector.broadcast %cst_5 : f32 to vector<16x256xf32>
    %8 = arith.maximumf %6, %7 : vector<16x256xf32>
    %9 = arith.truncf %8 : vector<16x256xf32> to vector<16x256xbf16>
    %c0_6 = arith.constant 0 : index
    %c0_7 = arith.constant 0 : index
    %10 = vector.load %arg4[%c0_6, %c0_7] : memref<256x128xbf16, #tpu.memory_space<vmem>>, vector<256x128xbf16>
    %cst_8 = arith.constant dense<0.000000e+00> : vector<16x128xf32>
    %11 = tpu.matmul %9, %10, %cst_8 {dimension_numbers = #tpu.dot_dimension_numbers<[1], [0], [0], [1], [0, 0, 1, 1], [], []>} : vector<16x256xbf16>, vector<256x128xbf16>, vector<16x128xf32> -> vector<16x128xf32>
    %c0_9 = arith.constant 0 : index
    %c0_10 = arith.constant 0 : index
    %12 = vector.load %arg5[%c0_9, %c0_10] : memref<1x128xf32, #tpu.memory_space<vmem>>, vector<1x128xf32>
    %13 = vector.broadcast %12 : vector<1x128xf32> to vector<16x128xf32>
    %14 = arith.addf %11, %13 : vector<16x128xf32>
    %cst_11 = arith.constant 0.000000e+00 : f32
    %15 = vector.broadcast %cst_11 : f32 to vector<16x128xf32>
    %16 = arith.maximumf %14, %15 : vector<16x128xf32>
    %17 = arith.truncf %16 : vector<16x128xf32> to vector<16x128xbf16>
    %c0_12 = arith.constant 0 : index
    %c0_13 = arith.constant 0 : index
    %18 = vector.load %arg6[%c0_12, %c0_13] : memref<128x128xbf16, #tpu.memory_space<vmem>>, vector<128x128xbf16>
    %cst_14 = arith.constant dense<0.000000e+00> : vector<16x128xf32>
    %19 = tpu.matmul %17, %18, %cst_14 {dimension_numbers = #tpu.dot_dimension_numbers<[1], [0], [0], [1], [0, 0, 1, 1], [], []>} : vector<16x128xbf16>, vector<128x128xbf16>, vector<16x128xf32> -> vector<16x128xf32>
    %c0_15 = arith.constant 0 : index
    %c0_16 = arith.constant 0 : index
    %20 = vector.load %arg7[%c0_15, %c0_16] : memref<1x128xf32, #tpu.memory_space<vmem>>, vector<1x128xf32>
    %21 = vector.broadcast %20 : vector<1x128xf32> to vector<16x128xf32>
    %22 = arith.addf %19, %21 : vector<16x128xf32>
    %cst_17 = arith.constant 0.000000e+00 : f32
    %23 = vector.broadcast %cst_17 : f32 to vector<16x128xf32>
    %24 = arith.maximumf %22, %23 : vector<16x128xf32>
    %25 = arith.truncf %24 : vector<16x128xf32> to vector<16x128xbf16>
    %c0_18 = arith.constant 0 : index
    %c0_19 = arith.constant 0 : index
    %26 = vector.load %arg8[%c0_18, %c0_19] : memref<128x128xbf16, #tpu.memory_space<vmem>>, vector<128x128xbf16>
    %cst_20 = arith.constant dense<0.000000e+00> : vector<16x128xf32>
    %27 = tpu.matmul %25, %26, %cst_20 {dimension_numbers = #tpu.dot_dimension_numbers<[1], [0], [0], [1], [0, 0, 1, 1], [], []>} : vector<16x128xbf16>, vector<128x128xbf16>, vector<16x128xf32> -> vector<16x128xf32>
    %c0_21 = arith.constant 0 : index
    %c0_22 = arith.constant 0 : index
    %28 = vector.load %arg9[%c0_21, %c0_22] : memref<1x128xf32, #tpu.memory_space<vmem>>, vector<1x128xf32>
    %29 = vector.broadcast %28 : vector<1x128xf32> to vector<16x128xf32>
    %30 = arith.addf %27, %29 : vector<16x128xf32>
    %cst_23 = arith.constant 0.000000e+00 : f32
    %31 = vector.broadcast %cst_23 : f32 to vector<16x128xf32>
    %32 = arith.maximumf %30, %31 : vector<16x128xf32>
    %33 = arith.truncf %32 : vector<16x128xf32> to vector<16x128xbf16>
    %c0_24 = arith.constant 0 : index
    %c0_25 = arith.constant 0 : index
    %34 = vector.load %arg10[%c0_24, %c0_25] : memref<128x128xbf16, #tpu.memory_space<vmem>>, vector<128x128xbf16>
    %cst_26 = arith.constant dense<0.000000e+00> : vector<16x128xf32>
    %35 = tpu.matmul %33, %34, %cst_26 {dimension_numbers = #tpu.dot_dimension_numbers<[1], [0], [0], [1], [0, 0, 1, 1], [], []>} : vector<16x128xbf16>, vector<128x128xbf16>, vector<16x128xf32> -> vector<16x128xf32>
    %c0_27 = arith.constant 0 : index
    %c0_28 = arith.constant 0 : index
    %36 = vector.load %arg11[%c0_27, %c0_28] : memref<1x128xf32, #tpu.memory_space<vmem>>, vector<1x128xf32>
    %37 = vector.broadcast %36 : vector<1x128xf32> to vector<16x128xf32>
    %38 = arith.addf %35, %37 : vector<16x128xf32>
    %c0_29 = arith.constant 0 : index
    %c0_30 = arith.constant 0 : index
    %39 = vector.load %arg12[%c0_29, %c0_30] : memref<16x128xf32, #tpu.memory_space<vmem>>, vector<16x128xf32>
    tpu.vector_store %arg12[%c0_29, %c0_30], %38 {strides = array<i32>} : memref<16x128xf32, #tpu.memory_space<vmem>>, vector<16x128xf32>,
    return
  }
  func.func @transform_0(%arg0: i32) -> (i32, i32) {
    %c0_i32 = arith.constant 0 : i32
    %c0_i32_0 = arith.constant 0 : i32
    return %arg0, %c0_i32 : i32, i32
  }
  func.func @transform_1(%arg0: i32) -> (i32, i32) {
    %c0_i32 = arith.constant 0 : i32
    %c0_i32_0 = arith.constant 0 : i32
    %c0_i32_1 = arith.constant 0 : i32
    return %c0_i32, %c0_i32_0 : i32, i32
  }
  func.func @transform_2(%arg0: i32) -> (i32, i32) {
    %c0_i32 = arith.constant 0 : i32
    %c0_i32_0 = arith.constant 0 : i32
    %c0_i32_1 = arith.constant 0 : i32
    return %c0_i32, %c0_i32_0 : i32, i32
  }
  func.func @transform_3(%arg0: i32) -> (i32, i32) {
    %c0_i32 = arith.constant 0 : i32
    %c0_i32_0 = arith.constant 0 : i32
    %c0_i32_1 = arith.constant 0 : i32
    return %c0_i32, %c0_i32_0 : i32, i32
  }
  func.func @transform_4(%arg0: i32) -> (i32, i32) {
    %c0_i32 = arith.constant 0 : i32
    %c0_i32_0 = arith.constant 0 : i32
    %c0_i32_1 = arith.constant 0 : i32
    return %c0_i32, %c0_i32_0 : i32, i32
  }
  func.func @transform_5(%arg0: i32) -> (i32, i32) {
    %c0_i32 = arith.constant 0 : i32
    %c0_i32_0 = arith.constant 0 : i32
    %c0_i32_1 = arith.constant 0 : i32
    return %c0_i32, %c0_i32_0 : i32, i32
  }
  func.func @transform_6(%arg0: i32) -> (i32, i32) {
    %c0_i32 = arith.constant 0 : i32
    %c0_i32_0 = arith.constant 0 : i32
    %c0_i32_1 = arith.constant 0 : i32
    return %c0_i32, %c0_i32_0 : i32, i32
  }
  func.func @transform_7(%arg0: i32) -> (i32, i32) {
    %c0_i32 = arith.constant 0 : i32
    %c0_i32_0 = arith.constant 0 : i32
    %c0_i32_1 = arith.constant 0 : i32
    return %c0_i32, %c0_i32_0 : i32, i32
  }
  func.func @transform_8(%arg0: i32) -> (i32, i32) {
    %c0_i32 = arith.constant 0 : i32
    %c0_i32_0 = arith.constant 0 : i32
    %c0_i32_1 = arith.constant 0 : i32
    return %c0_i32, %c0_i32_0 : i32, i32
  }
  func.func @transform_9(%arg0: i32) -> (i32, i32) {
    %c0_i32 = arith.constant 0 : i32
    %c0_i32_0 = arith.constant 0 : i32
    %c0_i32_1 = arith.constant 0 : i32
    return %c0_i32, %c0_i32_0 : i32, i32
  }
  func.func @transform_10(%arg0: i32) -> (i32, i32) {
    %c0_i32 = arith.constant 0 : i32
    %c0_i32_0 = arith.constant 0 : i32
    %c0_i32_1 = arith.constant 0 : i32
    return %c0_i32, %c0_i32_0 : i32, i32
  }
  func.func @transform_11(%arg0: i32) -> (i32, i32) {
    %c0_i32 = arith.constant 0 : i32
    %c0_i32_0 = arith.constant 0 : i32
    return %arg0, %c0_i32 : i32, i32
  }
}

</mosaic_0001>

<llo_original>
// kernel: tpu_custom_call.1
$region0: #{tpu_custom_call.1}
  #allocation0 [shape = 'u32[]', space=smem, size = 0x4, offset = 0x4, fixed_abs, tag = 'smem constant byte address 0x4 - core index']
  #allocation1 [shape = 'u32[144,128]{1,0:T(1,128)}', space=vmem, size = 0x12000, scoped, tag = 'internal scratch']
  %s0 = inlined_call_operand.hbm [shape: f32[16,512], index: 0, kind: input, shape index: {}]
  %s1 = inlined_call_operand.hbm [shape: bf16[512,256], index: 1, kind: input, shape index: {}]
  %s2 = inlined_call_operand.vmem [shape: f32[1,256], index: 2, kind: input, shape index: {}]
  %s3 = inlined_call_operand.hbm [shape: bf16[256,128], index: 3, kind: input, shape index: {}]
  %s4 = inlined_call_operand.vmem [shape: f32[1,128], index: 4, kind: input, shape index: {}]
  %s5 = inlined_call_operand.hbm [shape: bf16[128,128], index: 5, kind: input, shape index: {}]
  %s6 = inlined_call_operand.vmem [shape: f32[1,128], index: 6, kind: input, shape index: {}]
  %s7 = inlined_call_operand.hbm [shape: bf16[128,128], index: 7, kind: input, shape index: {}]
  %s8 = inlined_call_operand.vmem [shape: f32[1,128], index: 8, kind: input, shape index: {}]
  %s9 = inlined_call_operand.hbm [shape: bf16[128,128], index: 9, kind: input, shape index: {}]
  %s10 = inlined_call_operand.vmem [shape: f32[1,128], index: 10, kind: input, shape index: {}]
  %s11 = inlined_call_operand.hbm [shape: f32[16,128], index: 11, kind: output, shape index: {}]
  %s12 = sld [smem:[#allocation0]]
  $region78: #{tpu_custom_call.1} parent=0
    _
  %s14 = ssub.s32 1, %s12
  %s15 = scalar_select 0, %s14, %s12
  $region1: #{tpu_custom_call.1} parent=0
    #allocation2 [shape = 'u8[32768]{0}', space=vmem, size = 0x8000, scoped, tag = 'input window, operand 0, single buffered']
    #allocation3 [shape = 's32[1]{0}', space=sflag, size = 0x4, scoped, tag = 'scoped memory for tpu_custom_call.1']
    #allocation4 [shape = 's32[1]{0}', space=sflag, size = 0x4, scoped, tag = 'scoped memory for tpu_custom_call.1']
    #allocation5 [shape = 'u8[262144]{0}', space=vmem, size = 0x40000, scoped, tag = 'input window, operand 1, single buffered']
    #allocation6 [shape = 's32[1]{0}', space=sflag, size = 0x4, scoped, tag = 'scoped memory for tpu_custom_call.1']
    #allocation7 [shape = 'u8[65536]{0}', space=vmem, size = 0x10000, scoped, tag = 'input window, operand 3, single buffered']
    #allocation8 [shape = 'u8[32768]{0}', space=vmem, size = 0x8000, scoped, tag = 'input window, operand 5, single buffered']
    #allocation9 [shape = 's32[1]{0}', space=sflag, size = 0x4, scoped, tag = 'scoped memory for tpu_custom_call.1']
    #allocation10 [shape = 'u8[32768]{0}', space=vmem, size = 0x8000, scoped, tag = 'input window, operand 7, single buffered']
    #allocation11 [shape = 'u8[32768]{0}', space=vmem, size = 0x8000, scoped, tag = 'input window, operand 9, single buffered']
    #allocation12 [shape = 's32[1]{0}', space=sflag, size = 0x4, scoped, tag = 'scoped memory for tpu_custom_call.1']
    #allocation13 [shape = 'u8[8192]{0}', space=vmem, size = 0x2000, scoped, tag = 'output window, operand 0, single buffered']
    %16 = vsyncpa [#allocation3], 0
    %17 = vsyncpa [#allocation6], 0
    %18 = vsyncpa [#allocation9], 0
    %19 = vsyncpa [#allocation12], 0
    %20 = vsyncpa [#allocation4], 0
    // Predicated region
    $region2: #{tpu_custom_call.1} parent=1 // pred_check
      _
    $region3: #{tpu_custom_call.1} parent=1 // pred_check_branch
      %22 = sbr.rel (0) target = $region5
    $region4: #{tpu_custom_call.1} parent=1 // pred_region
      %s24 = ssub.s32 1024, 1024
      %25 = vsyncadd [#allocation3], %s24
      %s26 = sshll.u32 [#allocation2], 4
      %s27 = int_to_ptr.vmem [resolvable:$true] %s26
      %32 = dma.hbm_to_vmem [thread:$0]  %s0, 1024, %s27, [#allocation3], 512, 512, 32
    $region5: #{tpu_custom_call.1} parent=1 // pred_fallthru
      _
    // Predicated region
    $region6: #{tpu_custom_call.1} parent=1 // pred_check
      _
    $region7: #{tpu_custom_call.1} parent=1 // pred_check_branch
      %34 = sbr.rel (0) target = $region9
    $region8: #{tpu_custom_call.1} parent=1 // pred_region
      %s36 = ssub.s32 8192, 8192
      %37 = vsyncadd [#allocation6], %s36
      %s38 = sshll.u32 [#allocation5], 4
      %s39 = int_to_ptr.vmem [resolvable:$true] %s38
      %44 = dma.hbm_to_vmem [thread:$0]  %s1, 8192, %s39, [#allocation6], 128, 128, 8
    $region9: #{tpu_custom_call.1} parent=1 // pred_fallthru
      _
    // Predicated region
    $region10: #{tpu_custom_call.1} parent=1 // pred_check
      _
    $region11: #{tpu_custom_call.1} parent=1 // pred_check_branch
      %46 = sbr.rel (0) target = $region13
    $region12: #{tpu_custom_call.1} parent=1 // pred_region
      _
    $region13: #{tpu_custom_call.1} parent=1 // pred_fallthru
      _
    // Predicated region
    $region14: #{tpu_custom_call.1} parent=1 // pred_check
      _
    $region15: #{tpu_custom_call.1} parent=1 // pred_check_branch
      %48 = sbr.rel (0) target = $region17
    $region16: #{tpu_custom_call.1} parent=1 // pred_region
      %s50 = ssub.s32 2048, 2048
      %51 = vsyncadd [#allocation6], %s50
      %s52 = sshll.u32 [#allocation7], 4
      %s53 = int_to_ptr.vmem [resolvable:$true] %s52
      %58 = dma.hbm_to_vmem [thread:$0]  %s3, 2048, %s53, [#allocation6], 64, 64, 4
    $region17: #{tpu_custom_call.1} parent=1 // pred_fallthru
      _
    // Predicated region
    $region18: #{tpu_custom_call.1} parent=1 // pred_check
      _
    $region19: #{tpu_custom_call.1} parent=1 // pred_check_branch
      %60 = sbr.rel (0) target = $region21
    $region20: #{tpu_custom_call.1} parent=1 // pred_region
      _
    $region21: #{tpu_custom_call.1} parent=1 // pred_fallthru
      _
    // Predicated region
    $region22: #{tpu_custom_call.1} parent=1 // pred_check
      _
    $region23: #{tpu_custom_call.1} parent=1 // pred_check_branch
      %62 = sbr.rel (0) target = $region25
    $region24: #{tpu_custom_call.1} parent=1 // pred_region
      %s64 = ssub.s32 1024, 1024
      %65 = vsyncadd [#allocation9], %s64
      %s66 = sshll.u32 [#allocation8], 4
      %s67 = int_to_ptr.vmem [resolvable:$true] %s66
      %72 = dma.hbm_to_vmem [thread:$0]  %s5, 1024, %s67, [#allocation9], 64, 64, 4
    $region25: #{tpu_custom_call.1} parent=1 // pred_fallthru
      _
    // Predicated region
    $region26: #{tpu_custom_call.1} parent=1 // pred_check
      _
    $region27: #{tpu_custom_call.1} parent=1 // pred_check_branch
      %74 = sbr.rel (0) target = $region29
    $region28: #{tpu_custom_call.1} parent=1 // pred_region
      _
    $region29: #{tpu_custom_call.1} parent=1 // pred_fallthru
      _
    // Predicated region
    $region30: #{tpu_custom_call.1} parent=1 // pred_check
      _
    $region31: #{tpu_custom_call.1} parent=1 // pred_check_branch
      %76 = sbr.rel (0) target = $region33
    $region32: #{tpu_custom_call.1} parent=1 // pred_region
      %s78 = ssub.s32 1024, 1024
      %79 = vsyncadd [#allocation9], %s78
      %s80 = sshll.u32 [#allocation10], 4
      %s81 = int_to_ptr.vmem [resolvable:$true] %s80
      %86 = dma.hbm_to_vmem [thread:$0]  %s7, 1024, %s81, [#allocation9], 64, 64, 4
    $region33: #{tpu_custom_call.1} parent=1 // pred_fallthru
      _
    // Predicated region
    $region34: #{tpu_custom_call.1} parent=1 // pred_check
      _
    $region35: #{tpu_custom_call.1} parent=1 // pred_check_branch
      %88 = sbr.rel (0) target = $region37
    $region36: #{tpu_custom_call.1} parent=1 // pred_region
      _
    $region37: #{tpu_custom_call.1} parent=1 // pred_fallthru
      _
    // Predicated region
    $region38: #{tpu_custom_call.1} parent=1 // pred_check
      _
    $region39: #{tpu_custom_call.1} parent=1 // pred_check_branch
      %90 = sbr.rel (0) target = $region41
    $region40: #{tpu_custom_call.1} parent=1 // pred_region
      %s92 = ssub.s32 1024, 1024
      %93 = vsyncadd [#allocation12], %s92
      %s94 = sshll.u32 [#allocation11], 4
      %s95 = int_to_ptr.vmem [resolvable:$true] %s94
      %100 = dma.hbm_to_vmem [thread:$0]  %s9, 1024, %s95, [#allocation12], 64, 64, 4
    $region41: #{tpu_custom_call.1} parent=1 // pred_fallthru
      _
    // Predicated region
    $region42: #{tpu_custom_call.1} parent=1 // pred_check
      _
    $region43: #{tpu_custom_call.1} parent=1 // pred_check_branch
      %102 = sbr.rel (0) target = $region45
    $region44: #{tpu_custom_call.1} parent=1 // pred_region
      _
    $region45: #{tpu_custom_call.1} parent=1 // pred_fallthru
      _
    // Predicated region
    $region46: #{tpu_custom_call.1} parent=1 // pred_check
      _
    $region47: #{tpu_custom_call.1} parent=1 // pred_check_branch
      %104 = sbr.rel (0) target = $region49
    $region48: #{tpu_custom_call.1} parent=1 // pred_region
      %105 = dma.done [#allocation3], 1024
    $region49: #{tpu_custom_call.1} parent=1 // pred_fallthru
      _
    // Predicated region
    $region50: #{tpu_custom_call.1} parent=1 // pred_check
      _
    $region51: #{tpu_custom_call.1} parent=1 // pred_check_branch
      %107 = sbr.rel (0) target = $region53
    $region52: #{tpu_custom_call.1} parent=1 // pred_region
      %108 = dma.done [#allocation6], 8192
    $region53: #{tpu_custom_call.1} parent=1 // pred_fallthru
      _
    // Predicated region
    $region54: #{tpu_custom_call.1} parent=1 // pred_check
      _
    $region55: #{tpu_custom_call.1} parent=1 // pred_check_branch
      %110 = sbr.rel (0) target = $region57
    $region56: #{tpu_custom_call.1} parent=1 // pred_region
      %111 = dma.done [#allocation6], 2048
    $region57: #{tpu_custom_call.1} parent=1 // pred_fallthru
      _
    // Predicated region
    $region58: #{tpu_custom_call.1} parent=1 // pred_check
      _
    $region59: #{tpu_custom_call.1} parent=1 // pred_check_branch
      %113 = sbr.rel (0) target = $region61
    $region60: #{tpu_custom_call.1} parent=1 // pred_region
      %114 = dma.done [#allocation9], 1024
    $region61: #{tpu_custom_call.1} parent=1 // pred_fallthru
      _
    // Predicated region
    $region62: #{tpu_custom_call.1} parent=1 // pred_check
      _
    $region63: #{tpu_custom_call.1} parent=1 // pred_check_branch
      %116 = sbr.rel (0) target = $region65
    $region64: #{tpu_custom_call.1} parent=1 // pred_region
      %117 = dma.done [#allocation9], 1024
    $region65: #{tpu_custom_call.1} parent=1 // pred_fallthru
      _
    // Predicated region
    $region66: #{tpu_custom_call.1} parent=1 // pred_check
      _
    $region67: #{tpu_custom_call.1} parent=1 // pred_check_branch
      %119 = sbr.rel (0) target = $region69
    $region68: #{tpu_custom_call.1} parent=1 // pred_region
      %120 = dma.done [#allocation12], 1024
    $region69: #{tpu_custom_call.1} parent=1 // pred_fallthru
      _
    %v122 = vld [vmem:[#allocation2] sm:$0xff]
    %v123 = vld [vmem:[#allocation2 + $0x8] sm:$0xff]
    %v124 = vld [vmem:[#allocation2 + $0x10] sm:$0xff]
    %v125 = vld [vmem:[#allocation2 + $0x18] sm:$0xff]
    %v126 = vld [vmem:[#allocation2 + $0x20] sm:$0xff]
    %v127 = vld [vmem:[#allocation2 + $0x28] sm:$0xff]
    %v128 = vld [vmem:[#allocation2 + $0x30] sm:$0xff]
    %v129 = vld [vmem:[#allocation2 + $0x38] sm:$0xff]
    %v130 = vpack.c.bf16 %v126, %v122
    %v131 = vpack.c.bf16 %v127, %v123
    %v132 = vpack.c.bf16 %v128, %v124
    %v133 = vpack.c.bf16 %v129, %v125
    %v134 = vld [vmem:[#allocation5] sm:$0xff]
    %v135 = vld [vmem:[#allocation5 + $0x8] sm:$0xff]
    %v136 = vld [vmem:[#allocation5 + $0x10] sm:$0xff]
    %v137 = vld [vmem:[#allocation5 + $0x18] sm:$0xff]
    %v138 = vld [vmem:[#allocation5 + $0x20] sm:$0xff]
    %v139 = vld [vmem:[#allocation5 + $0x28] sm:$0xff]
    %v140 = vld [vmem:[#allocation5 + $0x30] sm:$0xff]
    %v141 = vld [vmem:[#allocation5 + $0x38] sm:$0xff]
    %v142 = vld [vmem:[#allocation5 + $0x40] sm:$0xff]
    %v143 = vld [vmem:[#allocation5 + $0x48] sm:$0xff]
    %v144 = vld [vmem:[#allocation5 + $0x50] sm:$0xff]
    %v145 = vld [vmem:[#allocation5 + $0x58] sm:$0xff]
    %v146 = vld [vmem:[#allocation5 + $0x60] sm:$0xff]
    %v147 = vld [vmem:[#allocation5 + $0x68] sm:$0xff]
    %v148 = vld [vmem:[#allocation5 + $0x70] sm:$0xff]
    %v149 = vld [vmem:[#allocation5 + $0x78] sm:$0xff]
    %v150 = vld [vmem:[#allocation5 + $0x80] sm:$0xff]
    %v151 = vld [vmem:[#allocation5 + $0x88] sm:$0xff]
    %v152 = vld [vmem:[#allocation5 + $0x90] sm:$0xff]
    %v153 = vld [vmem:[#allocation5 + $0x98] sm:$0xff]
    %v154 = vld [vmem:[#allocation5 + $0xa0] sm:$0xff]
    %v155 = vld [vmem:[#allocation5 + $0xa8] sm:$0xff]
    %v156 = vld [vmem:[#allocation5 + $0xb0] sm:$0xff]
    %v157 = vld [vmem:[#allocation5 + $0xb8] sm:$0xff]
    %v158 = vld [vmem:[#allocation5 + $0xc0] sm:$0xff]
    %v159 = vld [vmem:[#allocation5 + $0xc8] sm:$0xff]
    %v160 = vld [vmem:[#allocation5 + $0xd0] sm:$0xff]
    %v161 = vld [vmem:[#allocation5 + $0xd8] sm:$0xff]
    %v162 = vld [vmem:[#allocation5 + $0xe0] sm:$0xff]
    %v163 = vld [vmem:[#allocation5 + $0xe8] sm:$0xff]
    %v164 = vld [vmem:[#allocation5 + $0xf0] sm:$0xff]
    %v165 = vld [vmem:[#allocation5 + $0xf8] sm:$0xff]
    %v166 = vld [vmem:[#allocation5 + $0x100] sm:$0xff]
    %v167 = vld [vmem:[#allocation5 + $0x108] sm:$0xff]
    %v168 = vld [vmem:[#allocation5 + $0x110] sm:$0xff]
    %v169 = vld [vmem:[#allocation5 + $0x118] sm:$0xff]
    %v170 = vld [vmem:[#allocation5 + $0x120] sm:$0xff]
    %v171 = vld [vmem:[#allocation5 + $0x128] sm:$0xff]
    %v172 = vld [vmem:[#allocation5 + $0x130] sm:$0xff]
    %v173 = vld [vmem:[#allocation5 + $0x138] sm:$0xff]
    %v174 = vld [vmem:[#allocation5 + $0x140] sm:$0xff]
    %v175 = vld [vmem:[#allocation5 + $0x148] sm:$0xff]
    %v176 = vld [vmem:[#allocation5 + $0x150] sm:$0xff]
    %v177 = vld [vmem:[#allocation5 + $0x158] sm:$0xff]
    %v178 = vld [vmem:[#allocation5 + $0x160] sm:$0xff]
    %v179 = vld [vmem:[#allocation5 + $0x168] sm:$0xff]
    %v180 = vld [vmem:[#allocation5 + $0x170] sm:$0xff]
    %v181 = vld [vmem:[#allocation5 + $0x178] sm:$0xff]
    %v182 = vld [vmem:[#allocation5 + $0x180] sm:$0xff]
    %v183 = vld [vmem:[#allocation5 + $0x188] sm:$0xff]
    %v184 = vld [vmem:[#allocation5 + $0x190] sm:$0xff]
    %v185 = vld [vmem:[#allocation5 + $0x198] sm:$0xff]
    %v186 = vld [vmem:[#allocation5 + $0x1a0] sm:$0xff]
    %v187 = vld [vmem:[#allocation5 + $0x1a8] sm:$0xff]
    %v188 = vld [vmem:[#allocation5 + $0x1b0] sm:$0xff]
    %v189 = vld [vmem:[#allocation5 + $0x1b8] sm:$0xff]
    %v190 = vld [vmem:[#allocation5 + $0x1c0] sm:$0xff]
    %v191 = vld [vmem:[#allocation5 + $0x1c8] sm:$0xff]
    %v192 = vld [vmem:[#allocation5 + $0x1d0] sm:$0xff]
    %v193 = vld [vmem:[#allocation5 + $0x1d8] sm:$0xff]
    %v194 = vld [vmem:[#allocation5 + $0x1e0] sm:$0xff]
    %v195 = vld [vmem:[#allocation5 + $0x1e8] sm:$0xff]
    %v196 = vld [vmem:[#allocation5 + $0x1f0] sm:$0xff]
    %v197 = vld [vmem:[#allocation5 + $0x1f8] sm:$0xff]
    %v198 = vld [vmem:[%s2] sm:$0x3]
    %v200 = vlaneseq
    %v201 = vshrl.u32 %v200, 7
    %v202 = vsub.s32 0, %v201
    %v203 = vrot.slane %v198, %v202
    %v204 = vlaneseq
    %v205 = vshrl.u32 %v204, 7
    %v206 = vsub.s32 1, %v205
    %v207 = vrot.slane %v198, %v206
    %v274 = vunpack.c.l.b16 %v134
    %v275 = vunpack.c.h.b16 %v134
    %v276 = vunpack.c.l.b16 %v135
    %v277 = vunpack.c.h.b16 %v135
    %v278 = vunpack.c.l.b16 %v136
    %v279 = vunpack.c.h.b16 %v136
    %v280 = vunpack.c.l.b16 %v137
    %v281 = vunpack.c.h.b16 %v137
    %v282 = vunpack.c.l.b16 %v138
    %v283 = vunpack.c.h.b16 %v138
    %v284 = vunpack.c.l.b16 %v139
    %v285 = vunpack.c.h.b16 %v139
    %v286 = vunpack.c.l.b16 %v140
    %v287 = vunpack.c.h.b16 %v140
    %v288 = vunpack.c.l.b16 %v141
    %v289 = vunpack.c.h.b16 %v141
    %v290 = vunpack.c.l.b16 %v142
    %v291 = vunpack.c.h.b16 %v142
    %v292 = vunpack.c.l.b16 %v143
    %v293 = vunpack.c.h.b16 %v143
    %v294 = vunpack.c.l.b16 %v144
    %v295 = vunpack.c.h.b16 %v144
    %v296 = vunpack.c.l.b16 %v145
    %v297 = vunpack.c.h.b16 %v145
    %v298 = vunpack.c.l.b16 %v146
    %v299 = vunpack.c.h.b16 %v146
    %v300 = vunpack.c.l.b16 %v147
    %v301 = vunpack.c.h.b16 %v147
    %v302 = vunpack.c.l.b16 %v148
    %v303 = vunpack.c.h.b16 %v148
    %v304 = vunpack.c.l.b16 %v149
    %v305 = vunpack.c.h.b16 %v149
    %v306 = vunpack.c.l.b16 %v150
    %v307 = vunpack.c.h.b16 %v150
    %v308 = vunpack.c.l.b16 %v151
    %v309 = vunpack.c.h.b16 %v151
    %v310 = vunpack.c.l.b16 %v152
    %v311 = vunpack.c.h.b16 %v152
    %v312 = vunpack.c.l.b16 %v153
    %v313 = vunpack.c.h.b16 %v153
    %v314 = vunpack.c.l.b16 %v154
    %v315 = vunpack.c.h.b16 %v154
    %v316 = vunpack.c.l.b16 %v155
    %v317 = vunpack.c.h.b16 %v155
    %v318 = vunpack.c.l.b16 %v156
    %v319 = vunpack.c.h.b16 %v156
    %v320 = vunpack.c.l.b16 %v157
    %v321 = vunpack.c.h.b16 %v157
    %v322 = vunpack.c.l.b16 %v158
    %v323 = vunpack.c.h.b16 %v158
    %v324 = vunpack.c.l.b16 %v159
    %v325 = vunpack.c.h.b16 %v159
    %v326 = vunpack.c.l.b16 %v160
    %v327 = vunpack.c.h.b16 %v160
    %v328 = vunpack.c.l.b16 %v161
    %v329 = vunpack.c.h.b16 %v161
    %v330 = vunpack.c.l.b16 %v162
    %v331 = vunpack.c.h.b16 %v162
    %v332 = vunpack.c.l.b16 %v163
    %v333 = vunpack.c.h.b16 %v163
    %v334 = vunpack.c.l.b16 %v164
    %v335 = vunpack.c.h.b16 %v164
    %v336 = vunpack.c.l.b16 %v165
    %v337 = vunpack.c.h.b16 %v165
    %v338 = vunpack.c.l.b16 %v166
    %v339 = vunpack.c.h.b16 %v166
    %v340 = vunpack.c.l.b16 %v167
    %v341 = vunpack.c.h.b16 %v167
    %v342 = vunpack.c.l.b16 %v168
    %v343 = vunpack.c.h.b16 %v168
    %v344 = vunpack.c.l.b16 %v169
    %v345 = vunpack.c.h.b16 %v169
    %v346 = vunpack.c.l.b16 %v170
    %v347 = vunpack.c.h.b16 %v170
    %v348 = vunpack.c.l.b16 %v171
    %v349 = vunpack.c.h.b16 %v171
    %v350 = vunpack.c.l.b16 %v172
    %v351 = vunpack.c.h.b16 %v172
    %v352 = vunpack.c.l.b16 %v173
    %v353 = vunpack.c.h.b16 %v173
    %v354 = vunpack.c.l.b16 %v174
    %v355 = vunpack.c.h.b16 %v174
    %v356 = vunpack.c.l.b16 %v175
    %v357 = vunpack.c.h.b16 %v175
    %v358 = vunpack.c.l.b16 %v176
    %v359 = vunpack.c.h.b16 %v176
    %v360 = vunpack.c.l.b16 %v177
    %v361 = vunpack.c.h.b16 %v177
    %v362 = vunpack.c.l.b16 %v178
    %v363 = vunpack.c.h.b16 %v178
    %v364 = vunpack.c.l.b16 %v179
    %v365 = vunpack.c.h.b16 %v179
    %v366 = vunpack.c.l.b16 %v180
    %v367 = vunpack.c.h.b16 %v180
    %v368 = vunpack.c.l.b16 %v181
    %v369 = vunpack.c.h.b16 %v181
    %v370 = vunpack.c.l.b16 %v182
    %v371 = vunpack.c.h.b16 %v182
    %v372 = vunpack.c.l.b16 %v183
    %v373 = vunpack.c.h.b16 %v183
    %v374 = vunpack.c.l.b16 %v184
    %v375 = vunpack.c.h.b16 %v184
    %v376 = vunpack.c.l.b16 %v185
    %v377 = vunpack.c.h.b16 %v185
    %v378 = vunpack.c.l.b16 %v186
    %v379 = vunpack.c.h.b16 %v186
    %v380 = vunpack.c.l.b16 %v187
    %v381 = vunpack.c.h.b16 %v187
    %v382 = vunpack.c.l.b16 %v188
    %v383 = vunpack.c.h.b16 %v188
    %v384 = vunpack.c.l.b16 %v189
    %v385 = vunpack.c.h.b16 %v189
    %v386 = vunpack.c.l.b16 %v190
    %v387 = vunpack.c.h.b16 %v190
    %v388 = vunpack.c.l.b16 %v191
    %v389 = vunpack.c.h.b16 %v191
    %v390 = vunpack.c.l.b16 %v192
    %v391 = vunpack.c.h.b16 %v192
    %v392 = vunpack.c.l.b16 %v193
    %v393 = vunpack.c.h.b16 %v193
    %v394 = vunpack.c.l.b16 %v194
    %v395 = vunpack.c.h.b16 %v194
    %v396 = vunpack.c.l.b16 %v195
    %v397 = vunpack.c.h.b16 %v195
    %v398 = vunpack.c.l.b16 %v196
    %v399 = vunpack.c.h.b16 %v196
    %v400 = vunpack.c.l.b16 %v197
    %v401 = vunpack.c.h.b16 %v197
    %v402 = vpack.c.b16 %v276, %v274
    %v403 = vpack.c.b16 %v277, %v275
    %v404 = vpack.c.b16 %v280, %v278
    %v405 = vpack.c.b16 %v281, %v279
    %v406 = vpack.c.b16 %v284, %v282
    %v407 = vpack.c.b16 %v285, %v283
    %v408 = vpack.c.b16 %v288, %v286
    %v409 = vpack.c.b16 %v289, %v287
    %v410 = vpack.c.b16 %v292, %v290
    %v411 = vpack.c.b16 %v293, %v291
    %v412 = vpack.c.b16 %v296, %v294
    %v413 = vpack.c.b16 %v297, %v295
    %v414 = vpack.c.b16 %v300, %v298
    %v415 = vpack.c.b16 %v301, %v299
    %v416 = vpack.c.b16 %v304, %v302
    %v417 = vpack.c.b16 %v305, %v303
    %v418 = vpack.c.b16 %v308, %v306
    %v419 = vpack.c.b16 %v309, %v307
    %v420 = vpack.c.b16 %v312, %v310
    %v421 = vpack.c.b16 %v313, %v311
    %v422 = vpack.c.b16 %v316, %v314
    %v423 = vpack.c.b16 %v317, %v315
    %v424 = vpack.c.b16 %v320, %v318
    %v425 = vpack.c.b16 %v321, %v319
    %v426 = vpack.c.b16 %v324, %v322
    %v427 = vpack.c.b16 %v325, %v323
    %v428 = vpack.c.b16 %v328, %v326
    %v429 = vpack.c.b16 %v329, %v327
    %v430 = vpack.c.b16 %v332, %v330
    %v431 = vpack.c.b16 %v333, %v331
    %v432 = vpack.c.b16 %v336, %v334
    %v433 = vpack.c.b16 %v337, %v335
    %v434 = vpack.c.b16 %v340, %v338
    %v435 = vpack.c.b16 %v341, %v339
    %v436 = vpack.c.b16 %v344, %v342
    %v437 = vpack.c.b16 %v345, %v343
    %v438 = vpack.c.b16 %v348, %v346
    %v439 = vpack.c.b16 %v349, %v347
    %v440 = vpack.c.b16 %v352, %v350
    %v441 = vpack.c.b16 %v353, %v351
    %v442 = vpack.c.b16 %v356, %v354
    %v443 = vpack.c.b16 %v357, %v355
    %v444 = vpack.c.b16 %v360, %v358
    %v445 = vpack.c.b16 %v361, %v359
    %v446 = vpack.c.b16 %v364, %v362
    %v447 = vpack.c.b16 %v365, %v363
    %v448 = vpack.c.b16 %v368, %v366
    %v449 = vpack.c.b16 %v369, %v367
    %v450 = vpack.c.b16 %v372, %v370
    %v451 = vpack.c.b16 %v373, %v371
    %v452 = vpack.c.b16 %v376, %v374
    %v453 = vpack.c.b16 %v377, %v375
    %v454 = vpack.c.b16 %v380, %v378
    %v455 = vpack.c.b16 %v381, %v379
    %v456 = vpack.c.b16 %v384, %v382
    %v457 = vpack.c.b16 %v385, %v383
    %v458 = vpack.c.b16 %v388, %v386
    %v459 = vpack.c.b16 %v389, %v387
    %v460 = vpack.c.b16 %v392, %v390
    %v461 = vpack.c.b16 %v393, %v391
    %v462 = vpack.c.b16 %v396, %v394
    %v463 = vpack.c.b16 %v397, %v395
    %v464 = vpack.c.b16 %v400, %v398
    %v465 = vpack.c.b16 %v401, %v399
    %530 = vmatprep.subr.bf16.mxu0 %v403
    %531 = vmatpush1.bf16.msra.mxu0 %v402
    %532 = vmatprep.subr.bf16.mxu0 %v405
    %533 = vmatpush1.bf16.msra.mxu0 %v404
    %534 = vmatprep.subr.bf16.mxu0 %v407
    %535 = vmatpush1.bf16.msra.mxu0 %v406
    %536 = vmatprep.subr.bf16.mxu0 %v409
    %537 = vmatpush1.bf16.msra.mxu0 %v408
    %538 = vmatprep.subr.bf16.mxu0 %v411
    %539 = vmatpush1.bf16.msra.mxu0 %v410
    %540 = vmatprep.subr.bf16.mxu0 %v413
    %541 = vmatpush1.bf16.msra.mxu0 %v412
    %542 = vmatprep.subr.bf16.mxu0 %v415
    %543 = vmatpush1.bf16.msra.mxu0 %v414
    %544 = vmatprep.subr.bf16.mxu0 %v417
    %545 = vmatpush1.bf16.msra.mxu0 %v416
    %546 = vmatprep.subr.bf16.mxu0 %v419
    %547 = vmatpush1.bf16.msra.mxu0 %v418
    %548 = vmatprep.subr.bf16.mxu0 %v421
    %549 = vmatpush1.bf16.msra.mxu0 %v420
    %550 = vmatprep.subr.bf16.mxu0 %v423
    %551 = vmatpush1.bf16.msra.mxu0 %v422
    %552 = vmatprep.subr.bf16.mxu0 %v425
    %553 = vmatpush1.bf16.msra.mxu0 %v424
    %554 = vmatprep.subr.bf16.mxu0 %v427
    %555 = vmatpush1.bf16.msra.mxu0 %v426
    %556 = vmatprep.subr.bf16.mxu0 %v429
    %557 = vmatpush1.bf16.msra.mxu0 %v428
    %558 = vmatprep.subr.bf16.mxu0 %v431
    %559 = vmatpush1.bf16.msra.mxu0 %v430
    %560 = vmatprep.subr.bf16.mxu0 %v433
    %561 = vmatpush1.bf16.msra.mxu0 %v432
    %562 = vmatprep.mubr.bf16.mxu0 %v131
    %563 = vmatmul.mubr.bf16.gmra.mrb[0].mxu0 %v130
    %v564 = vpop.f32.mrb[0].mxu0
    %v565 = vadd.f32 %v203, %v564
    %v566 = vpop.f32.mrb[0].mxu0
    %v567 = vadd.f32 %v207, %v566
    %v568 = vpop.f32.mrb[0].mxu0
    %v569 = vadd.f32 %v203, %v568
    %v570 = vpop.f32.mrb[0].mxu0
    %v571 = vadd.f32 %v207, %v570
    %572 = vdwg.mxu0
    %573 = vmatprep.subr.bf16.mxu0 %v435
    %574 = vmatpush1.bf16.msra.mxu0 %v434
    %575 = vmatprep.subr.bf16.mxu0 %v437
    %576 = vmatpush1.bf16.msra.mxu0 %v436
    %577 = vmatprep.subr.bf16.mxu0 %v439
    %578 = vmatpush1.bf16.msra.mxu0 %v438
    %579 = vmatprep.subr.bf16.mxu0 %v441
    %580 = vmatpush1.bf16.msra.mxu0 %v440
    %581 = vmatprep.subr.bf16.mxu0 %v443
    %582 = vmatpush1.bf16.msra.mxu0 %v442
    %583 = vmatprep.subr.bf16.mxu0 %v445
    %584 = vmatpush1.bf16.msra.mxu0 %v444
    %585 = vmatprep.subr.bf16.mxu0 %v447
    %586 = vmatpush1.bf16.msra.mxu0 %v446
    %587 = vmatprep.subr.bf16.mxu0 %v449
    %588 = vmatpush1.bf16.msra.mxu0 %v448
    %589 = vmatprep.subr.bf16.mxu0 %v451
    %590 = vmatpush1.bf16.msra.mxu0 %v450
    %591 = vmatprep.subr.bf16.mxu0 %v453
    %592 = vmatpush1.bf16.msra.mxu0 %v452
    %593 = vmatprep.subr.bf16.mxu0 %v455
    %594 = vmatpush1.bf16.msra.mxu0 %v454
    %595 = vmatprep.subr.bf16.mxu0 %v457
    %596 = vmatpush1.bf16.msra.mxu0 %v456
    %597 = vmatprep.subr.bf16.mxu0 %v459
    %598 = vmatpush1.bf16.msra.mxu0 %v458
    %599 = vmatprep.subr.bf16.mxu0 %v461
    %600 = vmatpush1.bf16.msra.mxu0 %v460
    %601 = vmatprep.subr.bf16.mxu0 %v463
    %602 = vmatpush1.bf16.msra.mxu0 %v462
    %603 = vmatprep.subr.bf16.mxu0 %v465
    %604 = vmatpush1.bf16.msra.mxu0 %v464
    %605 = vmatprep.mubr.bf16.mxu0 %v133
    %606 = vmatmul.mubr.bf16.gmra.mrb[0].mxu0 %v132
    %v607 = vpop.f32.mrb[0].mxu0
    %v608 = vadd.f32 %v565, %v607
    %v609 = vpop.f32.mrb[0].mxu0
    %v610 = vadd.f32 %v567, %v609
    %v611 = vpop.f32.mrb[0].mxu0
    %v612 = vadd.f32 %v569, %v611
    %v613 = vpop.f32.mrb[0].mxu0
    %v614 = vadd.f32 %v571, %v613
    %615 = vdwg.mxu0
    %v616 = vmax.f32 %v608, 0.0
    %v617 = vmax.f32 %v610, 0.0
    %v618 = vmax.f32 %v612, 0.0
    %v619 = vmax.f32 %v614, 0.0
    %v620 = vpack.c.bf16 %v618, %v616
    %v621 = vpack.c.bf16 %v619, %v617
    %v622 = vld [vmem:[#allocation7] sm:$0xf]
    %v623 = vld [vmem:[#allocation7 + $0x4] sm:$0xf]
    %v624 = vld [vmem:[#allocation7 + $0x8] sm:$0xf]
    %v625 = vld [vmem:[#allocation7 + $0xc] sm:$0xf]
    %v626 = vld [vmem:[#allocation7 + $0x10] sm:$0xf]
    %v627 = vld [vmem:[#allocation7 + $0x14] sm:$0xf]
    %v628 = vld [vmem:[#allocation7 + $0x18] sm:$0xf]
    %v629 = vld [vmem:[#allocation7 + $0x1c] sm:$0xf]
    %v630 = vld [vmem:[#allocation7 + $0x20] sm:$0xf]
    %v631 = vld [vmem:[#allocation7 + $0x24] sm:$0xf]
    %v632 = vld [vmem:[#allocation7 + $0x28] sm:$0xf]
    %v633 = vld [vmem:[#allocation7 + $0x2c] sm:$0xf]
    %v634 = vld [vmem:[#allocation7 + $0x30] sm:$0xf]
    %v635 = vld [vmem:[#allocation7 + $0x34] sm:$0xf]
    %v636 = vld [vmem:[#allocation7 + $0x38] sm:$0xf]
    %v637 = vld [vmem:[#allocation7 + $0x3c] sm:$0xf]
    %v638 = vld [vmem:[#allocation7 + $0x40] sm:$0xf]
    %v639 = vld [vmem:[#allocation7 + $0x44] sm:$0xf]
    %v640 = vld [vmem:[#allocation7 + $0x48] sm:$0xf]
    %v641 = vld [vmem:[#allocation7 + $0x4c] sm:$0xf]
    %v642 = vld [vmem:[#allocation7 + $0x50] sm:$0xf]
    %v643 = vld [vmem:[#allocation7 + $0x54] sm:$0xf]
    %v644 = vld [vmem:[#allocation7 + $0x58] sm:$0xf]
    %v645 = vld [vmem:[#allocation7 + $0x5c] sm:$0xf]
    %v646 = vld [vmem:[#allocation7 + $0x60] sm:$0xf]
    %v647 = vld [vmem:[#allocation7 + $0x64] sm:$0xf]
    %v648 = vld [vmem:[#allocation7 + $0x68] sm:$0xf]
    %v649 = vld [vmem:[#allocation7 + $0x6c] sm:$0xf]
    %v650 = vld [vmem:[#allocation7 + $0x70] sm:$0xf]
    %v651 = vld [vmem:[#allocation7 + $0x74] sm:$0xf]
    %v652 = vld [vmem:[#allocation7 + $0x78] sm:$0xf]
    %v653 = vld [vmem:[#allocation7 + $0x7c] sm:$0xf]
    %v654 = vld [vmem:[%s4] sm:$0x1]
    %v656 = vlaneseq
    %v657 = vshrl.u32 %v656, 7
    %v658 = vsub.s32 0, %v657
    %v659 = vrot.slane %v654, %v658
    %v693 = vunpack.c.l.b16 %v622
    %v694 = vunpack.c.l.b16 %v623
    %v695 = vunpack.c.l.b16 %v624
    %v696 = vunpack.c.l.b16 %v625
    %v697 = vunpack.c.l.b16 %v626
    %v698 = vunpack.c.l.b16 %v627
    %v699 = vunpack.c.l.b16 %v628
    %v700 = vunpack.c.l.b16 %v629
    %v701 = vunpack.c.l.b16 %v630
    %v702 = vunpack.c.l.b16 %v631
    %v703 = vunpack.c.l.b16 %v632
    %v704 = vunpack.c.l.b16 %v633
    %v705 = vunpack.c.l.b16 %v634
    %v706 = vunpack.c.l.b16 %v635
    %v707 = vunpack.c.l.b16 %v636
    %v708 = vunpack.c.l.b16 %v637
    %v709 = vunpack.c.l.b16 %v638
    %v710 = vunpack.c.l.b16 %v639
    %v711 = vunpack.c.l.b16 %v640
    %v712 = vunpack.c.l.b16 %v641
    %v713 = vunpack.c.l.b16 %v642
    %v714 = vunpack.c.l.b16 %v643
    %v715 = vunpack.c.l.b16 %v644
    %v716 = vunpack.c.l.b16 %v645
    %v717 = vunpack.c.l.b16 %v646
    %v718 = vunpack.c.l.b16 %v647
    %v719 = vunpack.c.l.b16 %v648
    %v720 = vunpack.c.l.b16 %v649
    %v721 = vunpack.c.l.b16 %v650
    %v722 = vunpack.c.l.b16 %v651
    %v723 = vunpack.c.l.b16 %v652
    %v724 = vunpack.c.l.b16 %v653
    %v725 = vpack.c.b16 %v694, %v693
    %v726 = vpack.c.b16 %v696, %v695
    %v727 = vpack.c.b16 %v698, %v697
    %v728 = vpack.c.b16 %v700, %v699
    %v729 = vpack.c.b16 %v702, %v701
    %v730 = vpack.c.b16 %v704, %v703
    %v731 = vpack.c.b16 %v706, %v705
    %v732 = vpack.c.b16 %v708, %v707
    %v733 = vpack.c.b16 %v710, %v709
    %v734 = vpack.c.b16 %v712, %v711
    %v735 = vpack.c.b16 %v714, %v713
    %v736 = vpack.c.b16 %v716, %v715
    %v737 = vpack.c.b16 %v718, %v717
    %v738 = vpack.c.b16 %v720, %v719
    %v739 = vpack.c.b16 %v722, %v721
    %v740 = vpack.c.b16 %v724, %v723
    %757 = vmatprep.subr.bf16.mxu0 0
    %758 = vmatpush1.bf16.msra.mxu0 %v725
    %759 = vmatprep.subr.bf16.mxu0 0
    %760 = vmatpush1.bf16.msra.mxu0 %v726
    %761 = vmatprep.subr.bf16.mxu0 0
    %762 = vmatpush1.bf16.msra.mxu0 %v727
    %763 = vmatprep.subr.bf16.mxu0 0
    %764 = vmatpush1.bf16.msra.mxu0 %v728
    %765 = vmatprep.subr.bf16.mxu0 0
    %766 = vmatpush1.bf16.msra.mxu0 %v729
    %767 = vmatprep.subr.bf16.mxu0 0
    %768 = vmatpush1.bf16.msra.mxu0 %v730
    %769 = vmatprep.subr.bf16.mxu0 0
    %770 = vmatpush1.bf16.msra.mxu0 %v731
    %771 = vmatprep.subr.bf16.mxu0 0
    %772 = vmatpush1.bf16.msra.mxu0 %v732
    %773 = vmatprep.subr.bf16.mxu0 0
    %774 = vmatpush1.bf16.msra.mxu0 %v733
    %775 = vmatprep.subr.bf16.mxu0 0
    %776 = vmatpush1.bf16.msra.mxu0 %v734
    %777 = vmatprep.subr.bf16.mxu0 0
    %778 = vmatpush1.bf16.msra.mxu0 %v735
    %779 = vmatprep.subr.bf16.mxu0 0
    %780 = vmatpush1.bf16.msra.mxu0 %v736
    %781 = vmatprep.subr.bf16.mxu0 0
    %782 = vmatpush1.bf16.msra.mxu0 %v737
    %783 = vmatprep.subr.bf16.mxu0 0
    %784 = vmatpush1.bf16.msra.mxu0 %v738
    %785 = vmatprep.subr.bf16.mxu0 0
    %786 = vmatpush1.bf16.msra.mxu0 %v739
    %787 = vmatprep.subr.bf16.mxu0 0
    %788 = vmatpush1.bf16.msra.mxu0 %v740
    %789 = vmatprep.mubr.bf16.mxu0 %v621
    %790 = vmatmul.mubr.bf16.gmra.mrb[0].mxu0 %v620
    %v791 = vpop.f32.mrb[0].mxu0
    %v792 = vadd.f32 %v659, %v791
    %v793 = vpop.f32.mrb[0].mxu0
    %v794 = vpop.f32.mrb[0].mxu0
    %v795 = vadd.f32 %v659, %v794
    %v796 = vpop.f32.mrb[0].mxu0
    %797 = vdwg.mxu0
    %v798 = vmax.f32 %v792, 0.0
    %v799 = vmax.f32 %v795, 0.0
    %v800 = vpack.c.bf16 %v799, %v798
    %v801 = vld [vmem:[#allocation8] sm:$0xf]
    %v802 = vld [vmem:[#allocation8 + $0x4] sm:$0xf]
    %v803 = vld [vmem:[#allocation8 + $0x8] sm:$0xf]
    %v804 = vld [vmem:[#allocation8 + $0xc] sm:$0xf]
    %v805 = vld [vmem:[#allocation8 + $0x10] sm:$0xf]
    %v806 = vld [vmem:[#allocation8 + $0x14] sm:$0xf]
    %v807 = vld [vmem:[#allocation8 + $0x18] sm:$0xf]
    %v808 = vld [vmem:[#allocation8 + $0x1c] sm:$0xf]
    %v809 = vld [vmem:[#allocation8 + $0x20] sm:$0xf]
    %v810 = vld [vmem:[#allocation8 + $0x24] sm:$0xf]
    %v811 = vld [vmem:[#allocation8 + $0x28] sm:$0xf]
    %v812 = vld [vmem:[#allocation8 + $0x2c] sm:$0xf]
    %v813 = vld [vmem:[#allocation8 + $0x30] sm:$0xf]
    %v814 = vld [vmem:[#allocation8 + $0x34] sm:$0xf]
    %v815 = vld [vmem:[#allocation8 + $0x38] sm:$0xf]
    %v816 = vld [vmem:[#allocation8 + $0x3c] sm:$0xf]
    %v817 = vld [vmem:[%s6] sm:$0x1]
    %v819 = vlaneseq
    %v820 = vshrl.u32 %v819, 7
    %v821 = vsub.s32 0, %v820
    %v822 = vrot.slane %v817, %v821
    %v840 = vunpack.c.l.b16 %v801
    %v841 = vunpack.c.l.b16 %v802
    %v842 = vunpack.c.l.b16 %v803
    %v843 = vunpack.c.l.b16 %v804
    %v844 = vunpack.c.l.b16 %v805
    %v845 = vunpack.c.l.b16 %v806
    %v846 = vunpack.c.l.b16 %v807
    %v847 = vunpack.c.l.b16 %v808
    %v848 = vunpack.c.l.b16 %v809
    %v849 = vunpack.c.l.b16 %v810
    %v850 = vunpack.c.l.b16 %v811
    %v851 = vunpack.c.l.b16 %v812
    %v852 = vunpack.c.l.b16 %v813
    %v853 = vunpack.c.l.b16 %v814
    %v854 = vunpack.c.l.b16 %v815
    %v855 = vunpack.c.l.b16 %v816
    %v856 = vpack.c.b16 %v841, %v840
    %v857 = vpack.c.b16 %v843, %v842
    %v858 = vpack.c.b16 %v845, %v844
    %v859 = vpack.c.b16 %v847, %v846
    %v860 = vpack.c.b16 %v849, %v848
    %v861 = vpack.c.b16 %v851, %v850
    %v862 = vpack.c.b16 %v853, %v852
    %v863 = vpack.c.b16 %v855, %v854
    %872 = vmatprep.subr.bf16.mxu0 0
    %873 = vmatpush1.bf16.msra.mxu0 %v856
    %874 = vmatprep.subr.bf16.mxu0 0
    %875 = vmatpush1.bf16.msra.mxu0 %v857
    %876 = vmatprep.subr.bf16.mxu0 0
    %877 = vmatpush1.bf16.msra.mxu0 %v858
    %878 = vmatprep.subr.bf16.mxu0 0
    %879 = vmatpush1.bf16.msra.mxu0 %v859
    %880 = vmatprep.subr.bf16.mxu0 0
    %881 = vmatpush1.bf16.msra.mxu0 %v860
    %882 = vmatprep.subr.bf16.mxu0 0
    %883 = vmatpush1.bf16.msra.mxu0 %v861
    %884 = vmatprep.subr.bf16.mxu0 0
    %885 = vmatpush1.bf16.msra.mxu0 %v862
    %886 = vmatprep.subr.bf16.mxu0 0
    %887 = vmatpush1.bf16.msra.mxu0 %v863
    %888 = vmatprep.subr.bf16.mxu0 0
    %889 = vmatpush1.bf16.msra.mxu0 0
    %890 = vmatprep.subr.bf16.mxu0 0
    %891 = vmatpush1.bf16.msra.mxu0 0
    %892 = vmatprep.subr.bf16.mxu0 0
    %893 = vmatpush1.bf16.msra.mxu0 0
    %894 = vmatprep.subr.bf16.mxu0 0
    %895 = vmatpush1.bf16.msra.mxu0 0
    %896 = vmatprep.subr.bf16.mxu0 0
    %897 = vmatpush1.bf16.msra.mxu0 0
    %898 = vmatprep.subr.bf16.mxu0 0
    %899 = vmatpush1.bf16.msra.mxu0 0
    %900 = vmatprep.subr.bf16.mxu0 0
    %901 = vmatpush1.bf16.msra.mxu0 0
    %902 = vmatprep.subr.bf16.mxu0 0
    %903 = vmatpush1.bf16.msra.mxu0 0
    %904 = vmatprep.mubr.bf16.mxu0 0
    %905 = vmatmul.mubr.bf16.gmra.mrb[0].mxu0 %v800
    %v906 = vpop.f32.mrb[0].mxu0
    %v907 = vadd.f32 %v822, %v906
    %v908 = vpop.f32.mrb[0].mxu0
    %v909 = vpop.f32.mrb[0].mxu0
    %v910 = vadd.f32 %v822, %v909
    %v911 = vpop.f32.mrb[0].mxu0
    %912 = vdwg.mxu0
    %v913 = vmax.f32 %v907, 0.0
    %v914 = vmax.f32 %v910, 0.0
    %v915 = vpack.c.bf16 %v914, %v913
    %v916 = vld [vmem:[#allocation10] sm:$0xf]
    %v917 = vld [vmem:[#allocation10 + $0x4] sm:$0xf]
    %v918 = vld [vmem:[#allocation10 + $0x8] sm:$0xf]
    %v919 = vld [vmem:[#allocation10 + $0xc] sm:$0xf]
    %v920 = vld [vmem:[#allocation10 + $0x10] sm:$0xf]
    %v921 = vld [vmem:[#allocation10 + $0x14] sm:$0xf]
    %v922 = vld [vmem:[#allocation10 + $0x18] sm:$0xf]
    %v923 = vld [vmem:[#allocation10 + $0x1c] sm:$0xf]
    %v924 = vld [vmem:[#allocation10 + $0x20] sm:$0xf]
    %v925 = vld [vmem:[#allocation10 + $0x24] sm:$0xf]
    %v926 = vld [vmem:[#allocation10 + $0x28] sm:$0xf]
    %v927 = vld [vmem:[#allocation10 + $0x2c] sm:$0xf]
    %v928 = vld [vmem:[#allocation10 + $0x30] sm:$0xf]
    %v929 = vld [vmem:[#allocation10 + $0x34] sm:$0xf]
    %v930 = vld [vmem:[#allocation10 + $0x38] sm:$0xf]
    %v931 = vld [vmem:[#allocation10 + $0x3c] sm:$0xf]
    %v932 = vld [vmem:[%s8] sm:$0x1]
    %v934 = vlaneseq
    %v935 = vshrl.u32 %v934, 7
    %v936 = vsub.s32 0, %v935
    %v937 = vrot.slane %v932, %v936
    %v955 = vunpack.c.l.b16 %v916
    %v956 = vunpack.c.l.b16 %v917
    %v957 = vunpack.c.l.b16 %v918
    %v958 = vunpack.c.l.b16 %v919
    %v959 = vunpack.c.l.b16 %v920
    %v960 = vunpack.c.l.b16 %v921
    %v961 = vunpack.c.l.b16 %v922
    %v962 = vunpack.c.l.b16 %v923
    %v963 = vunpack.c.l.b16 %v924
    %v964 = vunpack.c.l.b16 %v925
    %v965 = vunpack.c.l.b16 %v926
    %v966 = vunpack.c.l.b16 %v927
    %v967 = vunpack.c.l.b16 %v928
    %v968 = vunpack.c.l.b16 %v929
    %v969 = vunpack.c.l.b16 %v930
    %v970 = vunpack.c.l.b16 %v931
    %v971 = vpack.c.b16 %v956, %v955
    %v972 = vpack.c.b16 %v958, %v957
    %v973 = vpack.c.b16 %v960, %v959
    %v974 = vpack.c.b16 %v962, %v961
    %v975 = vpack.c.b16 %v964, %v963
    %v976 = vpack.c.b16 %v966, %v965
    %v977 = vpack.c.b16 %v968, %v967
    %v978 = vpack.c.b16 %v970, %v969
    %987 = vmatprep.subr.bf16.mxu0 0
    %988 = vmatpush1.bf16.msra.mxu0 %v971
    %989 = vmatprep.subr.bf16.mxu0 0
    %990 = vmatpush1.bf16.msra.mxu0 %v972
    %991 = vmatprep.subr.bf16.mxu0 0
    %992 = vmatpush1.bf16.msra.mxu0 %v973
    %993 = vmatprep.subr.bf16.mxu0 0
    %994 = vmatpush1.bf16.msra.mxu0 %v974
    %995 = vmatprep.subr.bf16.mxu0 0
    %996 = vmatpush1.bf16.msra.mxu0 %v975
    %997 = vmatprep.subr.bf16.mxu0 0
    %998 = vmatpush1.bf16.msra.mxu0 %v976
    %999 = vmatprep.subr.bf16.mxu0 0
    %1000 = vmatpush1.bf16.msra.mxu0 %v977
    %1001 = vmatprep.subr.bf16.mxu0 0
    %1002 = vmatpush1.bf16.msra.mxu0 %v978
    %1003 = vmatprep.subr.bf16.mxu0 0
    %1004 = vmatpush1.bf16.msra.mxu0 0
    %1005 = vmatprep.subr.bf16.mxu0 0
    %1006 = vmatpush1.bf16.msra.mxu0 0
    %1007 = vmatprep.subr.bf16.mxu0 0
    %1008 = vmatpush1.bf16.msra.mxu0 0
    %1009 = vmatprep.subr.bf16.mxu0 0
    %1010 = vmatpush1.bf16.msra.mxu0 0
    %1011 = vmatprep.subr.bf16.mxu0 0
    %1012 = vmatpush1.bf16.msra.mxu0 0
    %1013 = vmatprep.subr.bf16.mxu0 0
    %1014 = vmatpush1.bf16.msra.mxu0 0
    %1015 = vmatprep.subr.bf16.mxu0 0
    %1016 = vmatpush1.bf16.msra.mxu0 0
    %1017 = vmatprep.subr.bf16.mxu0 0
    %1018 = vmatpush1.bf16.msra.mxu0 0
    %1019 = vmatprep.mubr.bf16.mxu0 0
    %1020 = vmatmul.mubr.bf16.gmra.mrb[0].mxu0 %v915
    %v1021 = vpop.f32.mrb[0].mxu0
    %v1022 = vadd.f32 %v937, %v1021
    %v1023 = vpop.f32.mrb[0].mxu0
    %v1024 = vpop.f32.mrb[0].mxu0
    %v1025 = vadd.f32 %v937, %v1024
    %v1026 = vpop.f32.mrb[0].mxu0
    %1027 = vdwg.mxu0
    %v1028 = vmax.f32 %v1022, 0.0
    %v1029 = vmax.f32 %v1025, 0.0
    %v1030 = vpack.c.bf16 %v1029, %v1028
    %v1031 = vld [vmem:[#allocation11] sm:$0xf]
    %v1032 = vld [vmem:[#allocation11 + $0x4] sm:$0xf]
    %v1033 = vld [vmem:[#allocation11 + $0x8] sm:$0xf]
    %v1034 = vld [vmem:[#allocation11 + $0xc] sm:$0xf]
    %v1035 = vld [vmem:[#allocation11 + $0x10] sm:$0xf]
    %v1036 = vld [vmem:[#allocation11 + $0x14] sm:$0xf]
    %v1037 = vld [vmem:[#allocation11 + $0x18] sm:$0xf]
    %v1038 = vld [vmem:[#allocation11 + $0x1c] sm:$0xf]
    %v1039 = vld [vmem:[#allocation11 + $0x20] sm:$0xf]
    %v1040 = vld [vmem:[#allocation11 + $0x24] sm:$0xf]
    %v1041 = vld [vmem:[#allocation11 + $0x28] sm:$0xf]
    %v1042 = vld [vmem:[#allocation11 + $0x2c] sm:$0xf]
    %v1043 = vld [vmem:[#allocation11 + $0x30] sm:$0xf]
    %v1044 = vld [vmem:[#allocation11 + $0x34] sm:$0xf]
    %v1045 = vld [vmem:[#allocation11 + $0x38] sm:$0xf]
    %v1046 = vld [vmem:[#allocation11 + $0x3c] sm:$0xf]
    %v1047 = vld [vmem:[%s10] sm:$0x1]
    %v1049 = vlaneseq
    %v1050 = vshrl.u32 %v1049, 7
    %v1051 = vsub.s32 0, %v1050
    %v1052 = vrot.slane %v1047, %v1051
    %v1070 = vunpack.c.l.b16 %v1031
    %v1071 = vunpack.c.l.b16 %v1032
    %v1072 = vunpack.c.l.b16 %v1033
    %v1073 = vunpack.c.l.b16 %v1034
    %v1074 = vunpack.c.l.b16 %v1035
    %v1075 = vunpack.c.l.b16 %v1036
    %v1076 = vunpack.c.l.b16 %v1037
    %v1077 = vunpack.c.l.b16 %v1038
    %v1078 = vunpack.c.l.b16 %v1039
    %v1079 = vunpack.c.l.b16 %v1040
    %v1080 = vunpack.c.l.b16 %v1041
    %v1081 = vunpack.c.l.b16 %v1042
    %v1082 = vunpack.c.l.b16 %v1043
    %v1083 = vunpack.c.l.b16 %v1044
    %v1084 = vunpack.c.l.b16 %v1045
    %v1085 = vunpack.c.l.b16 %v1046
    %v1086 = vpack.c.b16 %v1071, %v1070
    %v1087 = vpack.c.b16 %v1073, %v1072
    %v1088 = vpack.c.b16 %v1075, %v1074
    %v1089 = vpack.c.b16 %v1077, %v1076
    %v1090 = vpack.c.b16 %v1079, %v1078
    %v1091 = vpack.c.b16 %v1081, %v1080
    %v1092 = vpack.c.b16 %v1083, %v1082
    %v1093 = vpack.c.b16 %v1085, %v1084
    %1102 = vmatprep.subr.bf16.mxu0 0
    %1103 = vmatpush1.bf16.msra.mxu0 %v1086
    %1104 = vmatprep.subr.bf16.mxu0 0
    %1105 = vmatpush1.bf16.msra.mxu0 %v1087
    %1106 = vmatprep.subr.bf16.mxu0 0
    %1107 = vmatpush1.bf16.msra.mxu0 %v1088
    %1108 = vmatprep.subr.bf16.mxu0 0
    %1109 = vmatpush1.bf16.msra.mxu0 %v1089
    %1110 = vmatprep.subr.bf16.mxu0 0
    %1111 = vmatpush1.bf16.msra.mxu0 %v1090
    %1112 = vmatprep.subr.bf16.mxu0 0
    %1113 = vmatpush1.bf16.msra.mxu0 %v1091
    %1114 = vmatprep.subr.bf16.mxu0 0
    %1115 = vmatpush1.bf16.msra.mxu0 %v1092
    %1116 = vmatprep.subr.bf16.mxu0 0
    %1117 = vmatpush1.bf16.msra.mxu0 %v1093
    %1118 = vmatprep.subr.bf16.mxu0 0
    %1119 = vmatpush1.bf16.msra.mxu0 0
    %1120 = vmatprep.subr.bf16.mxu0 0
    %1121 = vmatpush1.bf16.msra.mxu0 0
    %1122 = vmatprep.subr.bf16.mxu0 0
    %1123 = vmatpush1.bf16.msra.mxu0 0
    %1124 = vmatprep.subr.bf16.mxu0 0
    %1125 = vmatpush1.bf16.msra.mxu0 0
    %1126 = vmatprep.subr.bf16.mxu0 0
    %1127 = vmatpush1.bf16.msra.mxu0 0
    %1128 = vmatprep.subr.bf16.mxu0 0
    %1129 = vmatpush1.bf16.msra.mxu0 0
    %1130 = vmatprep.subr.bf16.mxu0 0
    %1131 = vmatpush1.bf16.msra.mxu0 0
    %1132 = vmatprep.subr.bf16.mxu0 0
    %1133 = vmatpush1.bf16.msra.mxu0 0
    %1134 = vmatprep.mubr.bf16.mxu0 0
    %1135 = vmatmul.mubr.bf16.gmra.mrb[0].mxu0 %v1030
    %v1136 = vpop.f32.mrb[0].mxu0
    %v1137 = vadd.f32 %v1052, %v1136
    %v1138 = vpop.f32.mrb[0].mxu0
    %v1139 = vpop.f32.mrb[0].mxu0
    %v1140 = vadd.f32 %v1052, %v1139
    %v1141 = vpop.f32.mrb[0].mxu0
    %1142 = vdwg.mxu0
    %1143 = vst [vmem:[#allocation13] sm:$0xff] %v1137
    %1144 = vst [vmem:[#allocation13 + $0x8] sm:$0xff] %v1140
    // Predicated region
    $region70: #{tpu_custom_call.1} parent=1 // pred_check
      _
    $region71: #{tpu_custom_call.1} parent=1 // pred_check_branch
      %1146 = sbr.rel (0) target = $region73
    $region72: #{tpu_custom_call.1} parent=1 // pred_region
      %s1148 = ssub.s32 256, 256
      %1149 = vsyncadd [#allocation4], %s1148
      %s1150 = sshll.u32 [#allocation13], 4
      %s1151 = int_to_ptr.vmem [resolvable:$true] %s1150
      %1156 = dma.vmem_to_hbm [thread:$0]  %s1151, 256, %s11, [#allocation4], 128, 128, 8
    $region73: #{tpu_custom_call.1} parent=1 // pred_fallthru
      _
    // Predicated region
    $region74: #{tpu_custom_call.1} parent=1 // pred_check
      _
    $region75: #{tpu_custom_call.1} parent=1 // pred_check_branch
      %1158 = sbr.rel (0) target = $region77
    $region76: #{tpu_custom_call.1} parent=1 // pred_region
      %1159 = dma.done [#allocation4], 256
    $region77: #{tpu_custom_call.1} parent=1 // pred_fallthru
      _
    %1160 = vsyncpa [#allocation3], 1
    %1161 = vsyncpa [#allocation6], 1
    %1162 = vsyncpa [#allocation9], 1
    %1163 = vsyncpa [#allocation12], 1
    %1164 = vsyncpa [#allocation4], 1

// kernel: tpu_custom_call.1
$region0: #{tpu_custom_call.1}
  #allocation0 [shape = 'u32[]', space=smem, size = 0x4, offset = 0x4, fixed_abs, tag = 'smem constant byte address 0x4 - core index']
  #allocation1 [shape = 'u32[144,128]{1,0:T(1,128)}', space=vmem, size = 0x12000, scoped, tag = 'internal scratch']
  %s0 = inlined_call_operand.hbm [shape: f32[16,512], index: 0, kind: input, shape index: {}]
  %s1 = inlined_call_operand.hbm [shape: bf16[512,256], index: 1, kind: input, shape index: {}]
  %s2 = inlined_call_operand.vmem [shape: f32[1,256], index: 2, kind: input, shape index: {}]
  %s3 = inlined_call_operand.hbm [shape: bf16[256,128], index: 3, kind: input, shape index: {}]
  %s4 = inlined_call_operand.vmem [shape: f32[1,128], index: 4, kind: input, shape index: {}]
  %s5 = inlined_call_operand.hbm [shape: bf16[128,128], index: 5, kind: input, shape index: {}]
  %s6 = inlined_call_operand.vmem [shape: f32[1,128], index: 6, kind: input, shape index: {}]
  %s7 = inlined_call_operand.hbm [shape: bf16[128,128], index: 7, kind: input, shape index: {}]
  %s8 = inlined_call_operand.vmem [shape: f32[1,128], index: 8, kind: input, shape index: {}]
  %s9 = inlined_call_operand.hbm [shape: bf16[128,128], index: 9, kind: input, shape index: {}]
  %s10 = inlined_call_operand.vmem [shape: f32[1,128], index: 10, kind: input, shape index: {}]
  %s11 = inlined_call_operand.hbm [shape: f32[16,128], index: 11, kind: output, shape index: {}]
  %s12 = sld [smem:[#allocation0]]
  $region78: #{tpu_custom_call.1} parent=0
    _
  %s14 = ssub.s32 1, %s12
  %s15 = scalar_select 0, %s14, %s12
  $region1: #{tpu_custom_call.1} parent=0
    #allocation2 [shape = 'u8[32768]{0}', space=vmem, size = 0x8000, scoped, tag = 'input window, operand 0, single buffered']
    #allocation3 [shape = 's32[1]{0}', space=sflag, size = 0x4, scoped, tag = 'scoped memory for tpu_custom_call.1']
    #allocation4 [shape = 's32[1]{0}', space=sflag, size = 0x4, scoped, tag = 'scoped memory for tpu_custom_call.1']
    #allocation5 [shape = 'u8[262144]{0}', space=vmem, size = 0x40000, scoped, tag = 'input window, operand 1, single buffered']
    #allocation6 [shape = 's32[1]{0}', space=sflag, size = 0x4, scoped, tag = 'scoped memory for tpu_custom_call.1']
    #allocation7 [shape = 'u8[65536]{0}', space=vmem, size = 0x10000, scoped, tag = 'input window, operand 3, single buffered']
    #allocation8 [shape = 'u8[32768]{0}', space=vmem, size = 0x8000, scoped, tag = 'input window, operand 5, single buffered']
    #allocation9 [shape = 's32[1]{0}', space=sflag, size = 0x4, scoped, tag = 'scoped memory for tpu_custom_call.1']
    #allocation10 [shape = 'u8[32768]{0}', space=vmem, size = 0x8000, scoped, tag = 'input window, operand 7, single buffered']
    #allocation11 [shape = 'u8[32768]{0}', space=vmem, size = 0x8000, scoped, tag = 'input window, operand 9, single buffered']
    #allocation12 [shape = 's32[1]{0}', space=sflag, size = 0x4, scoped, tag = 'scoped memory for tpu_custom_call.1']
    #allocation13 [shape = 'u8[8192]{0}', space=vmem, size = 0x2000, scoped, tag = 'output window, operand 0, single buffered']
    %16 = vsyncpa [#allocation3], 0
    %17 = vsyncpa [#allocation6], 0
    %18 = vsyncpa [#allocation9], 0
    %19 = vsyncpa [#allocation12], 0
    %20 = vsyncpa [#allocation4], 0
    // Predicated region
    $region2: #{tpu_custom_call.1} parent=1 // pred_check
      _
    $region3: #{tpu_custom_call.1} parent=1 // pred_check_branch
      %22 = sbr.rel (0) target = $region5
    $region4: #{tpu_custom_call.1} parent=1 // pred_region
      %s24 = ssub.s32 1024, 1024
      %25 = vsyncadd [#allocation3], %s24
      %s26 = sshll.u32 [#allocation2], 4
      %s27 = int_to_ptr.vmem [resolvable:$true] %s26
      %32 = dma.hbm_to_vmem [thread:$0]  %s0, 1024, %s27, [#allocation3], 512, 512, 32
    $region5: #{tpu_custom_call.1} parent=1 // pred_fallthru
      _
    // Predicated region
    $region6: #{tpu_custom_call.1} parent=1 // pred_check
      _
    $region7: #{tpu_custom_call.1} parent=1 // pred_check_branch
      %34 = sbr.rel (0) target = $region9
    $region8: #{tpu_custom_call.1} parent=1 // pred_region
      %s36 = ssub.s32 8192, 8192
      %37 = vsyncadd [#allocation6], %s36
      %s38 = sshll.u32 [#allocation5], 4
      %s39 = int_to_ptr.vmem [resolvable:$true] %s38
      %44 = dma.hbm_to_vmem [thread:$0]  %s1, 8192, %s39, [#allocation6], 128, 128, 8
    $region9: #{tpu_custom_call.1} parent=1 // pred_fallthru
      _
    // Predicated region
    $region10: #{tpu_custom_call.1} parent=1 // pred_check
      _
    $region11: #{tpu_custom_call.1} parent=1 // pred_check_branch
      %46 = sbr.rel (0) target = $region13
    $region12: #{tpu_custom_call.1} parent=1 // pred_region
      _
    $region13: #{tpu_custom_call.1} parent=1 // pred_fallthru
      _
    // Predicated region
    $region14: #{tpu_custom_call.1} parent=1 // pred_check
      _
    $region15: #{tpu_custom_call.1} parent=1 // pred_check_branch
      %48 = sbr.rel (0) target = $region17
    $region16: #{tpu_custom_call.1} parent=1 // pred_region
      %s50 = ssub.s32 2048, 2048
      %51 = vsyncadd [#allocation6], %s50
      %s52 = sshll.u32 [#allocation7], 4
      %s53 = int_to_ptr.vmem [resolvable:$true] %s52
      %58 = dma.hbm_to_vmem [thread:$0]  %s3, 2048, %s53, [#allocation6], 64, 64, 4
    $region17: #{tpu_custom_call.1} parent=1 // pred_fallthru
      _
    // Predicated region
    $region18: #{tpu_custom_call.1} parent=1 // pred_check
      _
    $region19: #{tpu_custom_call.1} parent=1 // pred_check_branch
      %60 = sbr.rel (0) target = $region21
    $region20: #{tpu_custom_call.1} parent=1 // pred_region
      _
    $region21: #{tpu_custom_call.1} parent=1 // pred_fallthru
      _
    // Predicated region
    $region22: #{tpu_custom_call.1} parent=1 // pred_check
      _
    $region23: #{tpu_custom_call.1} parent=1 // pred_check_branch
      %62 = sbr.rel (0) target = $region25
    $region24: #{tpu_custom_call.1} parent=1 // pred_region
      %s64 = ssub.s32 1024, 1024
      %65 = vsyncadd [#allocation9], %s64
      %s66 = sshll.u32 [#allocation8], 4
      %s67 = int_to_ptr.vmem [resolvable:$true] %s66
      %72 = dma.hbm_to_vmem [thread:$0]  %s5, 1024, %s67, [#allocation9], 64, 64, 4
    $region25: #{tpu_custom_call.1} parent=1 // pred_fallthru
      _
    // Predicated region
    $region26: #{tpu_custom_call.1} parent=1 // pred_check
      _
    $region27: #{tpu_custom_call.1} parent=1 // pred_check_branch
      %74 = sbr.rel (0) target = $region29
    $region28: #{tpu_custom_call.1} parent=1 // pred_region
      _
    $region29: #{tpu_custom_call.1} parent=1 // pred_fallthru
      _
    // Predicated region
    $region30: #{tpu_custom_call.1} parent=1 // pred_check
      _
    $region31: #{tpu_custom_call.1} parent=1 // pred_check_branch
      %76 = sbr.rel (0) target = $region33
    $region32: #{tpu_custom_call.1} parent=1 // pred_region
      %s78 = ssub.s32 1024, 1024
      %79 = vsyncadd [#allocation9], %s78
      %s80 = sshll.u32 [#allocation10], 4
      %s81 = int_to_ptr.vmem [resolvable:$true] %s80
      %86 = dma.hbm_to_vmem [thread:$0]  %s7, 1024, %s81, [#allocation9], 64, 64, 4
    $region33: #{tpu_custom_call.1} parent=1 // pred_fallthru
      _
    // Predicated region
    $region34: #{tpu_custom_call.1} parent=1 // pred_check
      _
    $region35: #{tpu_custom_call.1} parent=1 // pred_check_branch
      %88 = sbr.rel (0) target = $region37
    $region36: #{tpu_custom_call.1} parent=1 // pred_region
      _
    $region37: #{tpu_custom_call.1} parent=1 // pred_fallthru
      _
    // Predicated region
    $region38: #{tpu_custom_call.1} parent=1 // pred_check
      _
    $region39: #{tpu_custom_call.1} parent=1 // pred_check_branch
      %90 = sbr.rel (0) target = $region41
    $region40: #{tpu_custom_call.1} parent=1 // pred_region
      %s92 = ssub.s32 1024, 1024
      %93 = vsyncadd [#allocation12], %s92
      %s94 = sshll.u32 [#allocation11], 4
      %s95 = int_to_ptr.vmem [resolvable:$true] %s94
      %100 = dma.hbm_to_vmem [thread:$0]  %s9, 1024, %s95, [#allocation12], 64, 64, 4
    $region41: #{tpu_custom_call.1} parent=1 // pred_fallthru
      _
    // Predicated region
    $region42: #{tpu_custom_call.1} parent=1 // pred_check
      _
    $region43: #{tpu_custom_call.1} parent=1 // pred_check_branch
      %102 = sbr.rel (0) target = $region45
    $region44: #{tpu_custom_call.1} parent=1 // pred_region
      _
    $region45: #{tpu_custom_call.1} parent=1 // pred_fallthru
      _
    // Predicated region
    $region46: #{tpu_custom_call.1} parent=1 // pred_check
      _
    $region47: #{tpu_custom_call.1} parent=1 // pred_check_branch
      %104 = sbr.rel (0) target = $region49
    $region48: #{tpu_custom_call.1} parent=1 // pred_region
      %105 = dma.done [#allocation3], 1024
    $region49: #{tpu_custom_call.1} parent=1 // pred_fallthru
      _
    // Predicated region
    $region50: #{tpu_custom_call.1} parent=1 // pred_check
      _
    $region51: #{tpu_custom_call.1} parent=1 // pred_check_branch
      %107 = sbr.rel (0) target = $region53
    $region52: #{tpu_custom_call.1} parent=1 // pred_region
      %108 = dma.done [#allocation6], 8192
    $region53: #{tpu_custom_call.1} parent=1 // pred_fallthru
      _
    // Predicated region
    $region54: #{tpu_custom_call.1} parent=1 // pred_check
      _
    $region55: #{tpu_custom_call.1} parent=1 // pred_check_branch
      %110 = sbr.rel (0) target = $region57
    $region56: #{tpu_custom_call.1} parent=1 // pred_region
      %111 = dma.done [#allocation6], 2048
    $region57: #{tpu_custom_call.1} parent=1 // pred_fallthru
      _
    // Predicated region
    $region58: #{tpu_custom_call.1} parent=1 // pred_check
      _
    $region59: #{tpu_custom_call.1} parent=1 // pred_check_branch
      %113 = sbr.rel (0) target = $region61
    $region60: #{tpu_custom_call.1} parent=1 // pred_region
      %114 = dma.done [#allocation9], 1024
    $region61: #{tpu_custom_call.1} parent=1 // pred_fallthru
      _
    // Predicated region
    $region62: #{tpu_custom_call.1} parent=1 // pred_check
      _
    $region63: #{tpu_custom_call.1} parent=1 // pred_check_branch
      %116 = sbr.rel (0) target = $region65
    $region64: #{tpu_custom_call.1} parent=1 // pred_region
      %117 = dma.done [#allocation9], 1024
    $region65: #{tpu_custom_call.1} parent=1 // pred_fallthru
      _
    // Predicated region
    $region66: #{tpu_custom_call.1} parent=1 // pred_check
      _
    $region67: #{tpu_custom_call.1} parent=1 // pred_check_branch
      %119 = sbr.rel (0) target = $region69
    $region68: #{tpu_custom_call.1} parent=1 // pred_region
      %120 = dma.done [#allocation12], 1024
    $region69: #{tpu_custom_call.1} parent=1 // pred_fallthru
      _
    %v122 = vld [vmem:[#allocation2] sm:$0xff]
    %v123 = vld [vmem:[#allocation2 + $0x8] sm:$0xff]
    %v124 = vld [vmem:[#allocation2 + $0x10] sm:$0xff]
    %v125 = vld [vmem:[#allocation2 + $0x18] sm:$0xff]
    %v126 = vld [vmem:[#allocation2 + $0x20] sm:$0xff]
    %v127 = vld [vmem:[#allocation2 + $0x28] sm:$0xff]
    %v128 = vld [vmem:[#allocation2 + $0x30] sm:$0xff]
    %v129 = vld [vmem:[#allocation2 + $0x38] sm:$0xff]
    %v130 = vpack.c.bf16 %v126, %v122
    %v131 = vpack.c.bf16 %v127, %v123
    %v132 = vpack.c.bf16 %v128, %v124
    %v133 = vpack.c.bf16 %v129, %v125
    %v134 = vld [vmem:[#allocation5] sm:$0xff]
    %v135 = vld [vmem:[#allocation5 + $0x8] sm:$0xff]
    %v136 = vld [vmem:[#allocation5 + $0x10] sm:$0xff]
    %v137 = vld [vmem:[#allocation5 + $0x18] sm:$0xff]
    %v138 = vld [vmem:[#allocation5 + $0x20] sm:$0xff]
    %v139 = vld [vmem:[#allocation5 + $0x28] sm:$0xff]
    %v140 = vld [vmem:[#allocation5 + $0x30] sm:$0xff]
    %v141 = vld [vmem:[#allocation5 + $0x38] sm:$0xff]
    %v142 = vld [vmem:[#allocation5 + $0x40] sm:$0xff]
    %v143 = vld [vmem:[#allocation5 + $0x48] sm:$0xff]
    %v144 = vld [vmem:[#allocation5 + $0x50] sm:$0xff]
    %v145 = vld [vmem:[#allocation5 + $0x58] sm:$0xff]
    %v146 = vld [vmem:[#allocation5 + $0x60] sm:$0xff]
    %v147 = vld [vmem:[#allocation5 + $0x68] sm:$0xff]
    %v148 = vld [vmem:[#allocation5 + $0x70] sm:$0xff]
    %v149 = vld [vmem:[#allocation5 + $0x78] sm:$0xff]
    %v150 = vld [vmem:[#allocation5 + $0x80] sm:$0xff]
    %v151 = vld [vmem:[#allocation5 + $0x88] sm:$0xff]
    %v152 = vld [vmem:[#allocation5 + $0x90] sm:$0xff]
    %v153 = vld [vmem:[#allocation5 + $0x98] sm:$0xff]
    %v154 = vld [vmem:[#allocation5 + $0xa0] sm:$0xff]
    %v155 = vld [vmem:[#allocation5 + $0xa8] sm:$0xff]
    %v156 = vld [vmem:[#allocation5 + $0xb0] sm:$0xff]
    %v157 = vld [vmem:[#allocation5 + $0xb8] sm:$0xff]
    %v158 = vld [vmem:[#allocation5 + $0xc0] sm:$0xff]
    %v159 = vld [vmem:[#allocation5 + $0xc8] sm:$0xff]
    %v160 = vld [vmem:[#allocation5 + $0xd0] sm:$0xff]
    %v161 = vld [vmem:[#allocation5 + $0xd8] sm:$0xff]
    %v162 = vld [vmem:[#allocation5 + $0xe0] sm:$0xff]
    %v163 = vld [vmem:[#allocation5 + $0xe8] sm:$0xff]
    %v164 = vld [vmem:[#allocation5 + $0xf0] sm:$0xff]
    %v165 = vld [vmem:[#allocation5 + $0xf8] sm:$0xff]
    %v166 = vld [vmem:[#allocation5 + $0x100] sm:$0xff]
    %v167 = vld [vmem:[#allocation5 + $0x108] sm:$0xff]
    %v168 = vld [vmem:[#allocation5 + $0x110] sm:$0xff]
    %v169 = vld [vmem:[#allocation5 + $0x118] sm:$0xff]
    %v170 = vld [vmem:[#allocation5 + $0x120] sm:$0xff]
    %v171 = vld [vmem:[#allocation5 + $0x128] sm:$0xff]
    %v172 = vld [vmem:[#allocation5 + $0x130] sm:$0xff]
    %v173 = vld [vmem:[#allocation5 + $0x138] sm:$0xff]
    %v174 = vld [vmem:[#allocation5 + $0x140] sm:$0xff]
    %v175 = vld [vmem:[#allocation5 + $0x148] sm:$0xff]
    %v176 = vld [vmem:[#allocation5 + $0x150] sm:$0xff]
    %v177 = vld [vmem:[#allocation5 + $0x158] sm:$0xff]
    %v178 = vld [vmem:[#allocation5 + $0x160] sm:$0xff]
    %v179 = vld [vmem:[#allocation5 + $0x168] sm:$0xff]
    %v180 = vld [vmem:[#allocation5 + $0x170] sm:$0xff]
    %v181 = vld [vmem:[#allocation5 + $0x178] sm:$0xff]
    %v182 = vld [vmem:[#allocation5 + $0x180] sm:$0xff]
    %v183 = vld [vmem:[#allocation5 + $0x188] sm:$0xff]
    %v184 = vld [vmem:[#allocation5 + $0x190] sm:$0xff]
    %v185 = vld [vmem:[#allocation5 + $0x198] sm:$0xff]
    %v186 = vld [vmem:[#allocation5 + $0x1a0] sm:$0xff]
    %v187 = vld [vmem:[#allocation5 + $0x1a8] sm:$0xff]
    %v188 = vld [vmem:[#allocation5 + $0x1b0] sm:$0xff]
    %v189 = vld [vmem:[#allocation5 + $0x1b8] sm:$0xff]
    %v190 = vld [vmem:[#allocation5 + $0x1c0] sm:$0xff]
    %v191 = vld [vmem:[#allocation5 + $0x1c8] sm:$0xff]
    %v192 = vld [vmem:[#allocation5 + $0x1d0] sm:$0xff]
    %v193 = vld [vmem:[#allocation5 + $0x1d8] sm:$0xff]
    %v194 = vld [vmem:[#allocation5 + $0x1e0] sm:$0xff]
    %v195 = vld [vmem:[#allocation5 + $0x1e8] sm:$0xff]
    %v196 = vld [vmem:[#allocation5 + $0x1f0] sm:$0xff]
    %v197 = vld [vmem:[#allocation5 + $0x1f8] sm:$0xff]
    %v198 = vld [vmem:[%s2] sm:$0x3]
    %v200 = vlaneseq
    %v201 = vshrl.u32 %v200, 7
    %v202 = vsub.s32 0, %v201
    %v203 = vrot.slane %v198, %v202
    %v204 = vlaneseq
    %v205 = vshrl.u32 %v204, 7
    %v206 = vsub.s32 1, %v205
    %v207 = vrot.slane %v198, %v206
    %v274 = vunpack.c.l.b16 %v134
    %v275 = vunpack.c.h.b16 %v134
    %v276 = vunpack.c.l.b16 %v135
    %v277 = vunpack.c.h.b16 %v135
    %v278 = vunpack.c.l.b16 %v136
    %v279 = vunpack.c.h.b16 %v136
    %v280 = vunpack.c.l.b16 %v137
    %v281 = vunpack.c.h.b16 %v137
    %v282 = vunpack.c.l.b16 %v138
    %v283 = vunpack.c.h.b16 %v138
    %v284 = vunpack.c.l.b16 %v139
    %v285 = vunpack.c.h.b16 %v139
    %v286 = vunpack.c.l.b16 %v140
    %v287 = vunpack.c.h.b16 %v140
    %v288 = vunpack.c.l.b16 %v141
    %v289 = vunpack.c.h.b16 %v141
    %v290 = vunpack.c.l.b16 %v142
    %v291 = vunpack.c.h.b16 %v142
    %v292 = vunpack.c.l.b16 %v143
    %v293 = vunpack.c.h.b16 %v143
    %v294 = vunpack.c.l.b16 %v144
    %v295 = vunpack.c.h.b16 %v144
    %v296 = vunpack.c.l.b16 %v145
    %v297 = vunpack.c.h.b16 %v145
    %v298 = vunpack.c.l.b16 %v146
    %v299 = vunpack.c.h.b16 %v146
    %v300 = vunpack.c.l.b16 %v147
    %v301 = vunpack.c.h.b16 %v147
    %v302 = vunpack.c.l.b16 %v148
    %v303 = vunpack.c.h.b16 %v148
    %v304 = vunpack.c.l.b16 %v149
    %v305 = vunpack.c.h.b16 %v149
    %v306 = vunpack.c.l.b16 %v150
    %v307 = vunpack.c.h.b16 %v150
    %v308 = vunpack.c.l.b16 %v151
    %v309 = vunpack.c.h.b16 %v151
    %v310 = vunpack.c.l.b16 %v152
    %v311 = vunpack.c.h.b16 %v152
    %v312 = vunpack.c.l.b16 %v153
    %v313 = vunpack.c.h.b16 %v153
    %v314 = vunpack.c.l.b16 %v154
    %v315 = vunpack.c.h.b16 %v154
    %v316 = vunpack.c.l.b16 %v155
    %v317 = vunpack.c.h.b16 %v155
    %v318 = vunpack.c.l.b16 %v156
    %v319 = vunpack.c.h.b16 %v156
    %v320 = vunpack.c.l.b16 %v157
    %v321 = vunpack.c.h.b16 %v157
    %v322 = vunpack.c.l.b16 %v158
    %v323 = vunpack.c.h.b16 %v158
    %v324 = vunpack.c.l.b16 %v159
    %v325 = vunpack.c.h.b16 %v159
    %v326 = vunpack.c.l.b16 %v160
    %v327 = vunpack.c.h.b16 %v160
    %v328 = vunpack.c.l.b16 %v161
    %v329 = vunpack.c.h.b16 %v161
    %v330 = vunpack.c.l.b16 %v162
    %v331 = vunpack.c.h.b16 %v162
    %v332 = vunpack.c.l.b16 %v163
    %v333 = vunpack.c.h.b16 %v163
    %v334 = vunpack.c.l.b16 %v164
    %v335 = vunpack.c.h.b16 %v164
    %v336 = vunpack.c.l.b16 %v165
    %v337 = vunpack.c.h.b16 %v165
    %v338 = vunpack.c.l.b16 %v166
    %v339 = vunpack.c.h.b16 %v166
    %v340 = vunpack.c.l.b16 %v167
    %v341 = vunpack.c.h.b16 %v167
    %v342 = vunpack.c.l.b16 %v168
    %v343 = vunpack.c.h.b16 %v168
    %v344 = vunpack.c.l.b16 %v169
    %v345 = vunpack.c.h.b16 %v169
    %v346 = vunpack.c.l.b16 %v170
    %v347 = vunpack.c.h.b16 %v170
    %v348 = vunpack.c.l.b16 %v171
    %v349 = vunpack.c.h.b16 %v171
    %v350 = vunpack.c.l.b16 %v172
    %v351 = vunpack.c.h.b16 %v172
    %v352 = vunpack.c.l.b16 %v173
    %v353 = vunpack.c.h.b16 %v173
    %v354 = vunpack.c.l.b16 %v174
    %v355 = vunpack.c.h.b16 %v174
    %v356 = vunpack.c.l.b16 %v175
    %v357 = vunpack.c.h.b16 %v175
    %v358 = vunpack.c.l.b16 %v176
    %v359 = vunpack.c.h.b16 %v176
    %v360 = vunpack.c.l.b16 %v177
    %v361 = vunpack.c.h.b16 %v177
    %v362 = vunpack.c.l.b16 %v178
    %v363 = vunpack.c.h.b16 %v178
    %v364 = vunpack.c.l.b16 %v179
    %v365 = vunpack.c.h.b16 %v179
    %v366 = vunpack.c.l.b16 %v180
    %v367 = vunpack.c.h.b16 %v180
    %v368 = vunpack.c.l.b16 %v181
    %v369 = vunpack.c.h.b16 %v181
    %v370 = vunpack.c.l.b16 %v182
    %v371 = vunpack.c.h.b16 %v182
    %v372 = vunpack.c.l.b16 %v183
    %v373 = vunpack.c.h.b16 %v183
    %v374 = vunpack.c.l.b16 %v184
    %v375 = vunpack.c.h.b16 %v184
    %v376 = vunpack.c.l.b16 %v185
    %v377 = vunpack.c.h.b16 %v185
    %v378 = vunpack.c.l.b16 %v186
    %v379 = vunpack.c.h.b16 %v186
    %v380 = vunpack.c.l.b16 %v187
    %v381 = vunpack.c.h.b16 %v187
    %v382 = vunpack.c.l.b16 %v188
    %v383 = vunpack.c.h.b16 %v188
    %v384 = vunpack.c.l.b16 %v189
    %v385 = vunpack.c.h.b16 %v189
    %v386 = vunpack.c.l.b16 %v190
    %v387 = vunpack.c.h.b16 %v190
    %v388 = vunpack.c.l.b16 %v191
    %v389 = vunpack.c.h.b16 %v191
    %v390 = vunpack.c.l.b16 %v192
    %v391 = vunpack.c.h.b16 %v192
    %v392 = vunpack.c.l.b16 %v193
    %v393 = vunpack.c.h.b16 %v193
    %v394 = vunpack.c.l.b16 %v194
    %v395 = vunpack.c.h.b16 %v194
    %v396 = vunpack.c.l.b16 %v195
    %v397 = vunpack.c.h.b16 %v195
    %v398 = vunpack.c.l.b16 %v196
    %v399 = vunpack.c.h.b16 %v196
    %v400 = vunpack.c.l.b16 %v197
    %v401 = vunpack.c.h.b16 %v197
    %v402 = vpack.c.b16 %v276, %v274
    %v403 = vpack.c.b16 %v277, %v275
    %v404 = vpack.c.b16 %v280, %v278
    %v405 = vpack.c.b16 %v281, %v279
    %v406 = vpack.c.b16 %v284, %v282
    %v407 = vpack.c.b16 %v285, %v283
    %v408 = vpack.c.b16 %v288, %v286
    %v409 = vpack.c.b16 %v289, %v287
    %v410 = vpack.c.b16 %v292, %v290
    %v411 = vpack.c.b16 %v293, %v291
    %v412 = vpack.c.b16 %v296, %v294
    %v413 = vpack.c.b16 %v297, %v295
    %v414 = vpack.c.b16 %v300, %v298
    %v415 = vpack.c.b16 %v301, %v299
    %v416 = vpack.c.b16 %v304, %v302
    %v417 = vpack.c.b16 %v305, %v303
    %v418 = vpack.c.b16 %v308, %v306
    %v419 = vpack.c.b16 %v309, %v307
    %v420 = vpack.c.b16 %v312, %v310
    %v421 = vpack.c.b16 %v313, %v311
    %v422 = vpack.c.b16 %v316, %v314
    %v423 = vpack.c.b16 %v317, %v315
    %v424 = vpack.c.b16 %v320, %v318
    %v425 = vpack.c.b16 %v321, %v319
    %v426 = vpack.c.b16 %v324, %v322
    %v427 = vpack.c.b16 %v325, %v323
    %v428 = vpack.c.b16 %v328, %v326
    %v429 = vpack.c.b16 %v329, %v327
    %v430 = vpack.c.b16 %v332, %v330
    %v431 = vpack.c.b16 %v333, %v331
    %v432 = vpack.c.b16 %v336, %v334
    %v433 = vpack.c.b16 %v337, %v335
    %v434 = vpack.c.b16 %v340, %v338
    %v435 = vpack.c.b16 %v341, %v339
    %v436 = vpack.c.b16 %v344, %v342
    %v437 = vpack.c.b16 %v345, %v343
    %v438 = vpack.c.b16 %v348, %v346
    %v439 = vpack.c.b16 %v349, %v347
    %v440 = vpack.c.b16 %v352, %v350
    %v441 = vpack.c.b16 %v353, %v351
    %v442 = vpack.c.b16 %v356, %v354
    %v443 = vpack.c.b16 %v357, %v355
    %v444 = vpack.c.b16 %v360, %v358
    %v445 = vpack.c.b16 %v361, %v359
    %v446 = vpack.c.b16 %v364, %v362
    %v447 = vpack.c.b16 %v365, %v363
    %v448 = vpack.c.b16 %v368, %v366
    %v449 = vpack.c.b16 %v369, %v367
    %v450 = vpack.c.b16 %v372, %v370
    %v451 = vpack.c.b16 %v373, %v371
    %v452 = vpack.c.b16 %v376, %v374
    %v453 = vpack.c.b16 %v377, %v375
    %v454 = vpack.c.b16 %v380, %v378
    %v455 = vpack.c.b16 %v381, %v379
    %v456 = vpack.c.b16 %v384, %v382
    %v457 = vpack.c.b16 %v385, %v383
    %v458 = vpack.c.b16 %v388, %v386
    %v459 = vpack.c.b16 %v389, %v387
    %v460 = vpack.c.b16 %v392, %v390
    %v461 = vpack.c.b16 %v393, %v391
    %v462 = vpack.c.b16 %v396, %v394
    %v463 = vpack.c.b16 %v397, %v395
    %v464 = vpack.c.b16 %v400, %v398
    %v465 = vpack.c.b16 %v401, %v399
    %530 = vmatprep.subr.bf16.mxu0 %v403
    %531 = vmatpush1.bf16.msra.mxu0 %v402
    %532 = vmatprep.subr.bf16.mxu0 %v405
    %533 = vmatpush1.bf16.msra.mxu0 %v404
    %534 = vmatprep.subr.bf16.mxu0 %v407
    %535 = vmatpush1.bf16.msra.mxu0 %v406
    %536 = vmatprep.subr.bf16.mxu0 %v409
    %537 = vmatpush1.bf16.msra.mxu0 %v408
    %538 = vmatprep.subr.bf16.mxu0 %v411
    %539 = vmatpush1.bf16.msra.mxu0 %v410
    %540 = vmatprep.subr.bf16.mxu0 %v413
    %541 = vmatpush1.bf16.msra.mxu0 %v412
    %542 = vmatprep.subr.bf16.mxu0 %v415
    %543 = vmatpush1.bf16.msra.mxu0 %v414
    %544 = vmatprep.subr.bf16.mxu0 %v417
    %545 = vmatpush1.bf16.msra.mxu0 %v416
    %546 = vmatprep.subr.bf16.mxu0 %v419
    %547 = vmatpush1.bf16.msra.mxu0 %v418
    %548 = vmatprep.subr.bf16.mxu0 %v421
    %549 = vmatpush1.bf16.msra.mxu0 %v420
    %550 = vmatprep.subr.bf16.mxu0 %v423
    %551 = vmatpush1.bf16.msra.mxu0 %v422
    %552 = vmatprep.subr.bf16.mxu0 %v425
    %553 = vmatpush1.bf16.msra.mxu0 %v424
    %554 = vmatprep.subr.bf16.mxu0 %v427
    %555 = vmatpush1.bf16.msra.mxu0 %v426
    %556 = vmatprep.subr.bf16.mxu0 %v429
    %557 = vmatpush1.bf16.msra.mxu0 %v428
    %558 = vmatprep.subr.bf16.mxu0 %v431
    %559 = vmatpush1.bf16.msra.mxu0 %v430
    %560 = vmatprep.subr.bf16.mxu0 %v433
    %561 = vmatpush1.bf16.msra.mxu0 %v432
    %562 = vmatprep.mubr.bf16.mxu0 %v131
    %563 = vmatmul.mubr.bf16.gmra.mrb[0].mxu0 %v130
    %v564 = vpop.f32.mrb[0].mxu0
    %v565 = vadd.f32 %v203, %v564
    %v566 = vpop.f32.mrb[0].mxu0
    %v567 = vadd.f32 %v207, %v566
    %v568 = vpop.f32.mrb[0].mxu0
    %v569 = vadd.f32 %v203, %v568
    %v570 = vpop.f32.mrb[0].mxu0
    %v571 = vadd.f32 %v207, %v570
    %572 = vdwg.mxu0
    %573 = vmatprep.subr.bf16.mxu0 %v435
    %574 = vmatpush1.bf16.msra.mxu0 %v434
    %575 = vmatprep.subr.bf16.mxu0 %v437
    %576 = vmatpush1.bf16.msra.mxu0 %v436
    %577 = vmatprep.subr.bf16.mxu0 %v439
    %578 = vmatpush1.bf16.msra.mxu0 %v438
    %579 = vmatprep.subr.bf16.mxu0 %v441
    %580 = vmatpush1.bf16.msra.mxu0 %v440
    %581 = vmatprep.subr.bf16.mxu0 %v443
    %582 = vmatpush1.bf16.msra.mxu0 %v442
    %583 = vmatprep.subr.bf16.mxu0 %v445
    %584 = vmatpush1.bf16.msra.mxu0 %v444
    %585 = vmatprep.subr.bf16.mxu0 %v447
    %586 = vmatpush1.bf16.msra.mxu0 %v446
    %587 = vmatprep.subr.bf16.mxu0 %v449
    %588 = vmatpush1.bf16.msra.mxu0 %v448
    %589 = vmatprep.subr.bf16.mxu0 %v451
    %590 = vmatpush1.bf16.msra.mxu0 %v450
    %591 = vmatprep.subr.bf16.mxu0 %v453
    %592 = vmatpush1.bf16.msra.mxu0 %v452
    %593 = vmatprep.subr.bf16.mxu0 %v455
    %594 = vmatpush1.bf16.msra.mxu0 %v454
    %595 = vmatprep.subr.bf16.mxu0 %v457
    %596 = vmatpush1.bf16.msra.mxu0 %v456
    %597 = vmatprep.subr.bf16.mxu0 %v459
    %598 = vmatpush1.bf16.msra.mxu0 %v458
    %599 = vmatprep.subr.bf16.mxu0 %v461
    %600 = vmatpush1.bf16.msra.mxu0 %v460
    %601 = vmatprep.subr.bf16.mxu0 %v463
    %602 = vmatpush1.bf16.msra.mxu0 %v462
    %603 = vmatprep.subr.bf16.mxu0 %v465
    %604 = vmatpush1.bf16.msra.mxu0 %v464
    %605 = vmatprep.mubr.bf16.mxu0 %v133
    %606 = vmatmul.mubr.bf16.gmra.mrb[0].mxu0 %v132
    %v607 = vpop.f32.mrb[0].mxu0
    %v608 = vadd.f32 %v565, %v607
    %v609 = vpop.f32.mrb[0].mxu0
    %v610 = vadd.f32 %v567, %v609
    %v611 = vpop.f32.mrb[0].mxu0
    %v612 = vadd.f32 %v569, %v611
    %v613 = vpop.f32.mrb[0].mxu0
    %v614 = vadd.f32 %v571, %v613
    %615 = vdwg.mxu0
    %v616 = vmax.f32 %v608, 0.0
    %v617 = vmax.f32 %v610, 0.0
    %v618 = vmax.f32 %v612, 0.0
    %v619 = vmax.f32 %v614, 0.0
    %v620 = vpack.c.bf16 %v618, %v616
    %v621 = vpack.c.bf16 %v619, %v617
    %v622 = vld [vmem:[#allocation7] sm:$0xf]
    %v623 = vld [vmem:[#allocation7 + $0x4] sm:$0xf]
    %v624 = vld [vmem:[#allocation7 + $0x8] sm:$0xf]
    %v625 = vld [vmem:[#allocation7 + $0xc] sm:$0xf]
    %v626 = vld [vmem:[#allocation7 + $0x10] sm:$0xf]
    %v627 = vld [vmem:[#allocation7 + $0x14] sm:$0xf]
    %v628 = vld [vmem:[#allocation7 + $0x18] sm:$0xf]
    %v629 = vld [vmem:[#allocation7 + $0x1c] sm:$0xf]
    %v630 = vld [vmem:[#allocation7 + $0x20] sm:$0xf]
    %v631 = vld [vmem:[#allocation7 + $0x24] sm:$0xf]
    %v632 = vld [vmem:[#allocation7 + $0x28] sm:$0xf]
    %v633 = vld [vmem:[#allocation7 + $0x2c] sm:$0xf]
    %v634 = vld [vmem:[#allocation7 + $0x30] sm:$0xf]
    %v635 = vld [vmem:[#allocation7 + $0x34] sm:$0xf]
    %v636 = vld [vmem:[#allocation7 + $0x38] sm:$0xf]
    %v637 = vld [vmem:[#allocation7 + $0x3c] sm:$0xf]
    %v638 = vld [vmem:[#allocation7 + $0x40] sm:$0xf]
    %v639 = vld [vmem:[#allocation7 + $0x44] sm:$0xf]
    %v640 = vld [vmem:[#allocation7 + $0x48] sm:$0xf]
    %v641 = vld [vmem:[#allocation7 + $0x4c] sm:$0xf]
    %v642 = vld [vmem:[#allocation7 + $0x50] sm:$0xf]
    %v643 = vld [vmem:[#allocation7 + $0x54] sm:$0xf]
    %v644 = vld [vmem:[#allocation7 + $0x58] sm:$0xf]
    %v645 = vld [vmem:[#allocation7 + $0x5c] sm:$0xf]
    %v646 = vld [vmem:[#allocation7 + $0x60] sm:$0xf]
    %v647 = vld [vmem:[#allocation7 + $0x64] sm:$0xf]
    %v648 = vld [vmem:[#allocation7 + $0x68] sm:$0xf]
    %v649 = vld [vmem:[#allocation7 + $0x6c] sm:$0xf]
    %v650 = vld [vmem:[#allocation7 + $0x70] sm:$0xf]
    %v651 = vld [vmem:[#allocation7 + $0x74] sm:$0xf]
    %v652 = vld [vmem:[#allocation7 + $0x78] sm:$0xf]
    %v653 = vld [vmem:[#allocation7 + $0x7c] sm:$0xf]
    %v654 = vld [vmem:[%s4] sm:$0x1]
    %v656 = vlaneseq
    %v657 = vshrl.u32 %v656, 7
    %v658 = vsub.s32 0, %v657
    %v659 = vrot.slane %v654, %v658
    %v693 = vunpack.c.l.b16 %v622
    %v694 = vunpack.c.l.b16 %v623
    %v695 = vunpack.c.l.b16 %v624
    %v696 = vunpack.c.l.b16 %v625
    %v697 = vunpack.c.l.b16 %v626
    %v698 = vunpack.c.l.b16 %v627
    %v699 = vunpack.c.l.b16 %v628
    %v700 = vunpack.c.l.b16 %v629
    %v701 = vunpack.c.l.b16 %v630
    %v702 = vunpack.c.l.b16 %v631
    %v703 = vunpack.c.l.b16 %v632
    %v704 = vunpack.c.l.b16 %v633
    %v705 = vunpack.c.l.b16 %v634
    %v706 = vunpack.c.l.b16 %v635
    %v707 = vunpack.c.l.b16 %v636
    %v708 = vunpack.c.l.b16 %v637
    %v709 = vunpack.c.l.b16 %v638
    %v710 = vunpack.c.l.b16 %v639
    %v711 = vunpack.c.l.b16 %v640
    %v712 = vunpack.c.l.b16 %v641
    %v713 = vunpack.c.l.b16 %v642
    %v714 = vunpack.c.l.b16 %v643
    %v715 = vunpack.c.l.b16 %v644
    %v716 = vunpack.c.l.b16 %v645
    %v717 = vunpack.c.l.b16 %v646
    %v718 = vunpack.c.l.b16 %v647
    %v719 = vunpack.c.l.b16 %v648
    %v720 = vunpack.c.l.b16 %v649
    %v721 = vunpack.c.l.b16 %v650
    %v722 = vunpack.c.l.b16 %v651
    %v723 = vunpack.c.l.b16 %v652
    %v724 = vunpack.c.l.b16 %v653
    %v725 = vpack.c.b16 %v694, %v693
    %v726 = vpack.c.b16 %v696, %v695
    %v727 = vpack.c.b16 %v698, %v697
    %v728 = vpack.c.b16 %v700, %v699
    %v729 = vpack.c.b16 %v702, %v701
    %v730 = vpack.c.b16 %v704, %v703
    %v731 = vpack.c.b16 %v706, %v705
    %v732 = vpack.c.b16 %v708, %v707
    %v733 = vpack.c.b16 %v710, %v709
    %v734 = vpack.c.b16 %v712, %v711
    %v735 = vpack.c.b16 %v714, %v713
    %v736 = vpack.c.b16 %v716, %v715
    %v737 = vpack.c.b16 %v718, %v717
    %v738 = vpack.c.b16 %v720, %v719
    %v739 = vpack.c.b16 %v722, %v721
    %v740 = vpack.c.b16 %v724, %v723
    %757 = vmatprep.subr.bf16.mxu0 0
    %758 = vmatpush1.bf16.msra.mxu0 %v725
    %759 = vmatprep.subr.bf16.mxu0 0
    %760 = vmatpush1.bf16.msra.mxu0 %v726
    %761 = vmatprep.subr.bf16.mxu0 0
    %762 = vmatpush1.bf16.msra.mxu0 %v727
    %763 = vmatprep.subr.bf16.mxu0 0
    %764 = vmatpush1.bf16.msra.mxu0 %v728
    %765 = vmatprep.subr.bf16.mxu0 0
    %766 = vmatpush1.bf16.msra.mxu0 %v729
    %767 = vmatprep.subr.bf16.mxu0 0
    %768 = vmatpush1.bf16.msra.mxu0 %v730
    %769 = vmatprep.subr.bf16.mxu0 0
    %770 = vmatpush1.bf16.msra.mxu0 %v731
    %771 = vmatprep.subr.bf16.mxu0 0
    %772 = vmatpush1.bf16.msra.mxu0 %v732
    %773 = vmatprep.subr.bf16.mxu0 0
    %774 = vmatpush1.bf16.msra.mxu0 %v733
    %775 = vmatprep.subr.bf16.mxu0 0
    %776 = vmatpush1.bf16.msra.mxu0 %v734
    %777 = vmatprep.subr.bf16.mxu0 0
    %778 = vmatpush1.bf16.msra.mxu0 %v735
    %779 = vmatprep.subr.bf16.mxu0 0
    %780 = vmatpush1.bf16.msra.mxu0 %v736
    %781 = vmatprep.subr.bf16.mxu0 0
    %782 = vmatpush1.bf16.msra.mxu0 %v737
    %783 = vmatprep.subr.bf16.mxu0 0
    %784 = vmatpush1.bf16.msra.mxu0 %v738
    %785 = vmatprep.subr.bf16.mxu0 0
    %786 = vmatpush1.bf16.msra.mxu0 %v739
    %787 = vmatprep.subr.bf16.mxu0 0
    %788 = vmatpush1.bf16.msra.mxu0 %v740
    %789 = vmatprep.mubr.bf16.mxu0 %v621
    %790 = vmatmul.mubr.bf16.gmra.mrb[0].mxu0 %v620
    %v791 = vpop.f32.mrb[0].mxu0
    %v792 = vadd.f32 %v659, %v791
    %v793 = vpop.f32.mrb[0].mxu0
    %v794 = vpop.f32.mrb[0].mxu0
    %v795 = vadd.f32 %v659, %v794
    %v796 = vpop.f32.mrb[0].mxu0
    %797 = vdwg.mxu0
    %v798 = vmax.f32 %v792, 0.0
    %v799 = vmax.f32 %v795, 0.0
    %v800 = vpack.c.bf16 %v799, %v798
    %v801 = vld [vmem:[#allocation8] sm:$0xf]
    %v802 = vld [vmem:[#allocation8 + $0x4] sm:$0xf]
    %v803 = vld [vmem:[#allocation8 + $0x8] sm:$0xf]
    %v804 = vld [vmem:[#allocation8 + $0xc] sm:$0xf]
    %v805 = vld [vmem:[#allocation8 + $0x10] sm:$0xf]
    %v806 = vld [vmem:[#allocation8 + $0x14] sm:$0xf]
    %v807 = vld [vmem:[#allocation8 + $0x18] sm:$0xf]
    %v808 = vld [vmem:[#allocation8 + $0x1c] sm:$0xf]
    %v809 = vld [vmem:[#allocation8 + $0x20] sm:$0xf]
    %v810 = vld [vmem:[#allocation8 + $0x24] sm:$0xf]
    %v811 = vld [vmem:[#allocation8 + $0x28] sm:$0xf]
    %v812 = vld [vmem:[#allocation8 + $0x2c] sm:$0xf]
    %v813 = vld [vmem:[#allocation8 + $0x30] sm:$0xf]
    %v814 = vld [vmem:[#allocation8 + $0x34] sm:$0xf]
    %v815 = vld [vmem:[#allocation8 + $0x38] sm:$0xf]
    %v816 = vld [vmem:[#allocation8 + $0x3c] sm:$0xf]
    %v817 = vld [vmem:[%s6] sm:$0x1]
    %v819 = vlaneseq
    %v820 = vshrl.u32 %v819, 7
    %v821 = vsub.s32 0, %v820
    %v822 = vrot.slane %v817, %v821
    %v840 = vunpack.c.l.b16 %v801
    %v841 = vunpack.c.l.b16 %v802
    %v842 = vunpack.c.l.b16 %v803
    %v843 = vunpack.c.l.b16 %v804
    %v844 = vunpack.c.l.b16 %v805
    %v845 = vunpack.c.l.b16 %v806
    %v846 = vunpack.c.l.b16 %v807
    %v847 = vunpack.c.l.b16 %v808
    %v848 = vunpack.c.l.b16 %v809
    %v849 = vunpack.c.l.b16 %v810
    %v850 = vunpack.c.l.b16 %v811
    %v851 = vunpack.c.l.b16 %v812
    %v852 = vunpack.c.l.b16 %v813
    %v853 = vunpack.c.l.b16 %v814
    %v854 = vunpack.c.l.b16 %v815
    %v855 = vunpack.c.l.b16 %v816
    %v856 = vpack.c.b16 %v841, %v840
    %v857 = vpack.c.b16 %v843, %v842
    %v858 = vpack.c.b16 %v845, %v844
    %v859 = vpack.c.b16 %v847, %v846
    %v860 = vpack.c.b16 %v849, %v848
    %v861 = vpack.c.b16 %v851, %v850
    %v862 = vpack.c.b16 %v853, %v852
    %v863 = vpack.c.b16 %v855, %v854
    %872 = vmatprep.subr.bf16.mxu0 0
    %873 = vmatpush1.bf16.msra.mxu0 %v856
    %874 = vmatprep.subr.bf16.mxu0 0
    %875 = vmatpush1.bf16.msra.mxu0 %v857
    %876 = vmatprep.subr.bf16.mxu0 0
    %877 = vmatpush1.bf16.msra.mxu0 %v858
    %878 = vmatprep.subr.bf16.mxu0 0
    %879 = vmatpush1.bf16.msra.mxu0 %v859
    %880 = vmatprep.subr.bf16.mxu0 0
    %881 = vmatpush1.bf16.msra.mxu0 %v860
    %882 = vmatprep.subr.bf16.mxu0 0
    %883 = vmatpush1.bf16.msra.mxu0 %v861
    %884 = vmatprep.subr.bf16.mxu0 0
    %885 = vmatpush1.bf16.msra.mxu0 %v862
    %886 = vmatprep.subr.bf16.mxu0 0
    %887 = vmatpush1.bf16.msra.mxu0 %v863
    %888 = vmatprep.subr.bf16.mxu0 0
    %889 = vmatpush1.bf16.msra.mxu0 0
    %890 = vmatprep.subr.bf16.mxu0 0
    %891 = vmatpush1.bf16.msra.mxu0 0
    %892 = vmatprep.subr.bf16.mxu0 0
    %893 = vmatpush1.bf16.msra.mxu0 0
    %894 = vmatprep.subr.bf16.mxu0 0
    %895 = vmatpush1.bf16.msra.mxu0 0
    %896 = vmatprep.subr.bf16.mxu0 0
    %897 = vmatpush1.bf16.msra.mxu0 0
    %898 = vmatprep.subr.bf16.mxu0 0
    %899 = vmatpush1.bf16.msra.mxu0 0
    %900 = vmatprep.subr.bf16.mxu0 0
    %901 = vmatpush1.bf16.msra.mxu0 0
    %902 = vmatprep.subr.bf16.mxu0 0
    %903 = vmatpush1.bf16.msra.mxu0 0
    %904 = vmatprep.mubr.bf16.mxu0 0
    %905 = vmatmul.mubr.bf16.gmra.mrb[0].mxu0 %v800
    %v906 = vpop.f32.mrb[0].mxu0
    %v907 = vadd.f32 %v822, %v906
    %v908 = vpop.f32.mrb[0].mxu0
    %v909 = vpop.f32.mrb[0].mxu0
    %v910 = vadd.f32 %v822, %v909
    %v911 = vpop.f32.mrb[0].mxu0
    %912 = vdwg.mxu0
    %v913 = vmax.f32 %v907, 0.0
    %v914 = vmax.f32 %v910, 0.0
    %v915 = vpack.c.bf16 %v914, %v913
    %v916 = vld [vmem:[#allocation10] sm:$0xf]
    %v917 = vld [vmem:[#allocation10 + $0x4] sm:$0xf]
    %v918 = vld [vmem:[#allocation10 + $0x8] sm:$0xf]
    %v919 = vld [vmem:[#allocation10 + $0xc] sm:$0xf]
    %v920 = vld [vmem:[#allocation10 + $0x10] sm:$0xf]
    %v921 = vld [vmem:[#allocation10 + $0x14] sm:$0xf]
    %v922 = vld [vmem:[#allocation10 + $0x18] sm:$0xf]
    %v923 = vld [vmem:[#allocation10 + $0x1c] sm:$0xf]
    %v924 = vld [vmem:[#allocation10 + $0x20] sm:$0xf]
    %v925 = vld [vmem:[#allocation10 + $0x24] sm:$0xf]
    %v926 = vld [vmem:[#allocation10 + $0x28] sm:$0xf]
    %v927 = vld [vmem:[#allocation10 + $0x2c] sm:$0xf]
    %v928 = vld [vmem:[#allocation10 + $0x30] sm:$0xf]
    %v929 = vld [vmem:[#allocation10 + $0x34] sm:$0xf]
    %v930 = vld [vmem:[#allocation10 + $0x38] sm:$0xf]
    %v931 = vld [vmem:[#allocation10 + $0x3c] sm:$0xf]
    %v932 = vld [vmem:[%s8] sm:$0x1]
    %v934 = vlaneseq
    %v935 = vshrl.u32 %v934, 7
    %v936 = vsub.s32 0, %v935
    %v937 = vrot.slane %v932, %v936
    %v955 = vunpack.c.l.b16 %v916
    %v956 = vunpack.c.l.b16 %v917
    %v957 = vunpack.c.l.b16 %v918
    %v958 = vunpack.c.l.b16 %v919
    %v959 = vunpack.c.l.b16 %v920
    %v960 = vunpack.c.l.b16 %v921
    %v961 = vunpack.c.l.b16 %v922
    %v962 = vunpack.c.l.b16 %v923
    %v963 = vunpack.c.l.b16 %v924
    %v964 = vunpack.c.l.b16 %v925
    %v965 = vunpack.c.l.b16 %v926
    %v966 = vunpack.c.l.b16 %v927
    %v967 = vunpack.c.l.b16 %v928
    %v968 = vunpack.c.l.b16 %v929
    %v969 = vunpack.c.l.b16 %v930
    %v970 = vunpack.c.l.b16 %v931
    %v971 = vpack.c.b16 %v956, %v955
    %v972 = vpack.c.b16 %v958, %v957
    %v973 = vpack.c.b16 %v960, %v959
    %v974 = vpack.c.b16 %v962, %v961
    %v975 = vpack.c.b16 %v964, %v963
    %v976 = vpack.c.b16 %v966, %v965
    %v977 = vpack.c.b16 %v968, %v967
    %v978 = vpack.c.b16 %v970, %v969
    %987 = vmatprep.subr.bf16.mxu0 0
    %988 = vmatpush1.bf16.msra.mxu0 %v971
    %989 = vmatprep.subr.bf16.mxu0 0
    %990 = vmatpush1.bf16.msra.mxu0 %v972
    %991 = vmatprep.subr.bf16.mxu0 0
    %992 = vmatpush1.bf16.msra.mxu0 %v973
    %993 = vmatprep.subr.bf16.mxu0 0
    %994 = vmatpush1.bf16.msra.mxu0 %v974
    %995 = vmatprep.subr.bf16.mxu0 0
    %996 = vmatpush1.bf16.msra.mxu0 %v975
    %997 = vmatprep.subr.bf16.mxu0 0
    %998 = vmatpush1.bf16.msra.mxu0 %v976
    %999 = vmatprep.subr.bf16.mxu0 0
    %1000 = vmatpush1.bf16.msra.mxu0 %v977
    %1001 = vmatprep.subr.bf16.mxu0 0
    %1002 = vmatpush1.bf16.msra.mxu0 %v978
    %1003 = vmatprep.subr.bf16.mxu0 0
    %1004 = vmatpush1.bf16.msra.mxu0 0
    %1005 = vmatprep.subr.bf16.mxu0 0
    %1006 = vmatpush1.bf16.msra.mxu0 0
    %1007 = vmatprep.subr.bf16.mxu0 0
    %1008 = vmatpush1.bf16.msra.mxu0 0
    %1009 = vmatprep.subr.bf16.mxu0 0
    %1010 = vmatpush1.bf16.msra.mxu0 0
    %1011 = vmatprep.subr.bf16.mxu0 0
    %1012 = vmatpush1.bf16.msra.mxu0 0
    %1013 = vmatprep.subr.bf16.mxu0 0
    %1014 = vmatpush1.bf16.msra.mxu0 0
    %1015 = vmatprep.subr.bf16.mxu0 0
    %1016 = vmatpush1.bf16.msra.mxu0 0
    %1017 = vmatprep.subr.bf16.mxu0 0
    %1018 = vmatpush1.bf16.msra.mxu0 0
    %1019 = vmatprep.mubr.bf16.mxu0 0
    %1020 = vmatmul.mubr.bf16.gmra.mrb[0].mxu0 %v915
    %v1021 = vpop.f32.mrb[0].mxu0
    %v1022 = vadd.f32 %v937, %v1021
    %v1023 = vpop.f32.mrb[0].mxu0
    %v1024 = vpop.f32.mrb[0].mxu0
    %v1025 = vadd.f32 %v937, %v1024
    %v1026 = vpop.f32.mrb[0].mxu0
    %1027 = vdwg.mxu0
    %v1028 = vmax.f32 %v1022, 0.0
    %v1029 = vmax.f32 %v1025, 0.0
    %v1030 = vpack.c.bf16 %v1029, %v1028
    %v1031 = vld [vmem:[#allocation11] sm:$0xf]
    %v1032 = vld [vmem:[#allocation11 + $0x4] sm:$0xf]
    %v1033 = vld [vmem:[#allocation11 + $0x8] sm:$0xf]
    %v1034 = vld [vmem:[#allocation11 + $0xc] sm:$0xf]
    %v1035 = vld [vmem:[#allocation11 + $0x10] sm:$0xf]
    %v1036 = vld [vmem:[#allocation11 + $0x14] sm:$0xf]
    %v1037 = vld [vmem:[#allocation11 + $0x18] sm:$0xf]
    %v1038 = vld [vmem:[#allocation11 + $0x1c] sm:$0xf]
    %v1039 = vld [vmem:[#allocation11 + $0x20] sm:$0xf]
    %v1040 = vld [vmem:[#allocation11 + $0x24] sm:$0xf]
    %v1041 = vld [vmem:[#allocation11 + $0x28] sm:$0xf]
    %v1042 = vld [vmem:[#allocation11 + $0x2c] sm:$0xf]
    %v1043 = vld [vmem:[#allocation11 + $0x30] sm:$0xf]
    %v1044 = vld [vmem:[#allocation11 + $0x34] sm:$0xf]
    %v1045 = vld [vmem:[#allocation11 + $0x38] sm:$0xf]
    %v1046 = vld [vmem:[#allocation11 + $0x3c] sm:$0xf]
    %v1047 = vld [vmem:[%s10] sm:$0x1]
    %v1049 = vlaneseq
    %v1050 = vshrl.u32 %v1049, 7
    %v1051 = vsub.s32 0, %v1050
    %v1052 = vrot.slane %v1047, %v1051
    %v1070 = vunpack.c.l.b16 %v1031
    %v1071 = vunpack.c.l.b16 %v1032
    %v1072 = vunpack.c.l.b16 %v1033
    %v1073 = vunpack.c.l.b16 %v1034
    %v1074 = vunpack.c.l.b16 %v1035
    %v1075 = vunpack.c.l.b16 %v1036
    %v1076 = vunpack.c.l.b16 %v1037
    %v1077 = vunpack.c.l.b16 %v1038
    %v1078 = vunpack.c.l.b16 %v1039
    %v1079 = vunpack.c.l.b16 %v1040
    %v1080 = vunpack.c.l.b16 %v1041
    %v1081 = vunpack.c.l.b16 %v1042
    %v1082 = vunpack.c.l.b16 %v1043
    %v1083 = vunpack.c.l.b16 %v1044
    %v1084 = vunpack.c.l.b16 %v1045
    %v1085 = vunpack.c.l.b16 %v1046
    %v1086 = vpack.c.b16 %v1071, %v1070
    %v1087 = vpack.c.b16 %v1073, %v1072
    %v1088 = vpack.c.b16 %v1075, %v1074
    %v1089 = vpack.c.b16 %v1077, %v1076
    %v1090 = vpack.c.b16 %v1079, %v1078
    %v1091 = vpack.c.b16 %v1081, %v1080
    %v1092 = vpack.c.b16 %v1083, %v1082
    %v1093 = vpack.c.b16 %v1085, %v1084
    %1102 = vmatprep.subr.bf16.mxu0 0
    %1103 = vmatpush1.bf16.msra.mxu0 %v1086
    %1104 = vmatprep.subr.bf16.mxu0 0
    %1105 = vmatpush1.bf16.msra.mxu0 %v1087
    %1106 = vmatprep.subr.bf16.mxu0 0
    %1107 = vmatpush1.bf16.msra.mxu0 %v1088
    %1108 = vmatprep.subr.bf16.mxu0 0
    %1109 = vmatpush1.bf16.msra.mxu0 %v1089
    %1110 = vmatprep.subr.bf16.mxu0 0
    %1111 = vmatpush1.bf16.msra.mxu0 %v1090
    %1112 = vmatprep.subr.bf16.mxu0 0
    %1113 = vmatpush1.bf16.msra.mxu0 %v1091
    %1114 = vmatprep.subr.bf16.mxu0 0
    %1115 = vmatpush1.bf16.msra.mxu0 %v1092
    %1116 = vmatprep.subr.bf16.mxu0 0
    %1117 = vmatpush1.bf16.msra.mxu0 %v1093
    %1118 = vmatprep.subr.bf16.mxu0 0
    %1119 = vmatpush1.bf16.msra.mxu0 0
    %1120 = vmatprep.subr.bf16.mxu0 0
    %1121 = vmatpush1.bf16.msra.mxu0 0
    %1122 = vmatprep.subr.bf16.mxu0 0
    %1123 = vmatpush1.bf16.msra.mxu0 0
    %1124 = vmatprep.subr.bf16.mxu0 0
    %1125 = vmatpush1.bf16.msra.mxu0 0
    %1126 = vmatprep.subr.bf16.mxu0 0
    %1127 = vmatpush1.bf16.msra.mxu0 0
    %1128 = vmatprep.subr.bf16.mxu0 0
    %1129 = vmatpush1.bf16.msra.mxu0 0
    %1130 = vmatprep.subr.bf16.mxu0 0
    %1131 = vmatpush1.bf16.msra.mxu0 0
    %1132 = vmatprep.subr.bf16.mxu0 0
    %1133 = vmatpush1.bf16.msra.mxu0 0
    %1134 = vmatprep.mubr.bf16.mxu0 0
    %1135 = vmatmul.mubr.bf16.gmra.mrb[0].mxu0 %v1030
    %v1136 = vpop.f32.mrb[0].mxu0
    %v1137 = vadd.f32 %v1052, %v1136
    %v1138 = vpop.f32.mrb[0].mxu0
    %v1139 = vpop.f32.mrb[0].mxu0
    %v1140 = vadd.f32 %v1052, %v1139
    %v1141 = vpop.f32.mrb[0].mxu0
    %1142 = vdwg.mxu0
    %1143 = vst [vmem:[#allocation13] sm:$0xff] %v1137
    %1144 = vst [vmem:[#allocation13 + $0x8] sm:$0xff] %v1140
    // Predicated region
    $region70: #{tpu_custom_call.1} parent=1 // pred_check
      _
    $region71: #{tpu_custom_call.1} parent=1 // pred_check_branch
      %1146 = sbr.rel (0) target = $region73
    $region72: #{tpu_custom_call.1} parent=1 // pred_region
      %s1148 = ssub.s32 256, 256
      %1149 = vsyncadd [#allocation4], %s1148
      %s1150 = sshll.u32 [#allocation13], 4
      %s1151 = int_to_ptr.vmem [resolvable:$true] %s1150
      %1156 = dma.vmem_to_hbm [thread:$0]  %s1151, 256, %s11, [#allocation4], 128, 128, 8
    $region73: #{tpu_custom_call.1} parent=1 // pred_fallthru
      _
    // Predicated region
    $region74: #{tpu_custom_call.1} parent=1 // pred_check
      _
    $region75: #{tpu_custom_call.1} parent=1 // pred_check_branch
      %1158 = sbr.rel (0) target = $region77
    $region76: #{tpu_custom_call.1} parent=1 // pred_region
      %1159 = dma.done [#allocation4], 256
    $region77: #{tpu_custom_call.1} parent=1 // pred_fallthru
      _
    %1160 = vsyncpa [#allocation3], 1
    %1161 = vsyncpa [#allocation6], 1
    %1162 = vsyncpa [#allocation9], 1
    %1163 = vsyncpa [#allocation12], 1
    %1164 = vsyncpa [#allocation4], 1

</llo_original>
